<compile_context>
chip_gen: v7x
topology: tpu7x:2x2x1
jax: 0.10.0
libtpu: 0.0.40
codegen_flags: <defaults>
</compile_context>

<pallas_src>
import jax
import jax.numpy as jnp
from jax.experimental import pallas as pl
from jax.experimental.pallas import tpu as pltpu

EPS = 1e-5


# ------------------------------------------------ weight folding (done once) --

def _fold_conv1(w):
    """(Cout, Cin, 3, 3) OIHW -> (Cout, 9*Cin); column block t = 3*dy + dx."""
    return jnp.concatenate([w[:, :, t // 3, t % 3] for t in range(9)], axis=1)


def _fold_subpixel(w):
    """(Cout, Cin, 3, 3) -> (4*Cout, 9*Cin) folded weights for conv3x3(up2(.)).

    Nearest-2x upsample followed by a SAME 3x3 conv, evaluated at output parity
    (a, b), is a conv on the *original* grid whose effective tap at source
    offset (fy, fx) sums the original taps (dy, dx) with
    fy = floor((a+dy-1)/2), fx = floor((b+dx-1)/2).
    Row block p = 2*a + b; column block t = 3*(fy+1) + (fx+1), matching the
    stacked-tap operand layout used inside the kernel.
    """
    cout, cin = w.shape[0], w.shape[1]
    par_rows = []
    for a in range(2):
        for b in range(2):
            blocks = [jnp.zeros((cout, cin), w.dtype) for _ in range(9)]
            for dy in range(3):
                fy = (a + dy - 1) // 2
                for dx in range(3):
                    fx = (b + dx - 1) // 2
                    t = 3 * (fy + 1) + (fx + 1)
                    blocks[t] = blocks[t] + w[:, :, dy, dx]
            par_rows.append(jnp.concatenate(blocks, axis=1))
    return jnp.concatenate(par_rows, axis=0)


def type2_prepare(p):
    """One-time folding of PyTorch-layout parameters into kernel operands."""
    cin = p["w1"].shape[0]
    cout = p["w2"].shape[0]
    return {
        "w1f": _fold_conv1(p["w1"]),                        # (Cin, 9*Cin)
        "w2p": _fold_subpixel(p["w2"]),                     # (4*Cout, 9*Cin)
        "w3p": _fold_subpixel(p["w3"]),                     # (4*Cout, 9*Cin)
        "b3p": jnp.tile(p["b3"], 4).reshape(4 * cout, 1),   # per parity-plane row
        "g1": p["g1"].reshape(cin, 1), "be1": p["be1"].reshape(cin, 1),
        "g2": p["g2"].reshape(cout, 1), "be2": p["be2"].reshape(cout, 1),
        # b1, b2 dropped: per-channel constants cancel in training-mode BN.
    }


# --------------------------------------------------------- fused forward ------

def type2_forward(x, prep):
    """Fused Pallas forward of type2.  x: (N, Cin, H, W) float32 NCHW."""
    n, cin, h, w = x.shape
    cout = prep["g2"].shape[0]
    wp = w + 2                       # padded row stride
    lb = (h + 3) * wp                # per-image flat block (1 top / 2 bottom pad rows)
    lt = n * lb                      # batch-concatenated flat length
    tail = 2 * (wp + 1)              # trailing zeros so every tap slice is in range
    inv1 = 1.0 / float(n * h * w)
    inv2 = 1.0 / float(n * 4 * h * w)
    offs = tuple(dy * wp + dx for dy in range(3) for dx in range(3))

    def kernel(xpf_ref, w1f_ref, w2p_ref, w3p_ref, b3p_ref,
               g1_ref, be1_ref, g2_ref, be2_ref, out_ref, s_ref, rp_ref):
        # Valid-pixel mask over the flat conv-output layout (per image block
        # the flat index is y*wp + x, valid iff y < h and x < w).
        j = jax.lax.broadcasted_iota(jnp.int32, (1, lt), 1)
        f = j % lb
        mask = ((f < h * wp) & ((f % wp) < w)).astype(jnp.float32)

        # Stacked 9-tap operand from the zero-padded flat input (review #2).
        xv = xpf_ref[...]                                    # (Cin, LT+TAIL)
        for t in range(9):
            s_ref[t * cin:(t + 1) * cin, :] = xv[:, offs[t]:offs[t] + lt]

        # Residual branch: all 4 parity planes of conv3(up2(x)) + b3 in one
        # dot, parked in VMEM scratch to keep vreg liveness low (review #4).
        rp_ref[...] = (jnp.dot(w3p_ref[...], s_ref[...],
                               preferred_element_type=jnp.float32)
                       + b3p_ref[...])

        # conv1 (bias cancels in BN1) + training-mode BN1.
        y1 = jnp.dot(w1f_ref[...], s_ref[...],
                     preferred_element_type=jnp.float32)     # (Cin, LT)
        s1 = jnp.sum(y1 * mask, axis=1, keepdims=True)
        q1 = jnp.sum(y1 * y1 * mask, axis=1, keepdims=True)
        m1 = s1 * inv1
        v1 = q1 * inv1 - m1 * m1
        sc1 = g1_ref[...] * jax.lax.rsqrt(v1 + EPS)
        sh1 = be1_ref[...] - m1 * sc1
        z = (sc1 * y1 + sh1) * mask                          # zero outside valid pixels

        # conv-output layout -> padded-input layout (lane shift by wp+1): the
        # masked zeros double as the zero padding of the following conv.
        zp = jnp.zeros((cin, wp + 1), jnp.float32)
        zsh = jnp.concatenate([zp, z, zp], axis=1)           # (Cin, LT+TAIL)

        # Stacked operand for conv2(up2(.)); reuses the same scratch.
        for t in range(9):
            s_ref[t * cin:(t + 1) * cin, :] = zsh[:, offs[t]:offs[t] + lt]

        # All 4 parity planes of conv2(up2(BN1 out)) in one dot (bias cancels).
        y2 = jnp.dot(w2p_ref[...], s_ref[...],
                     preferred_element_type=jnp.float32)     # (4*Cout, LT)

        # Training-mode BN2: per-channel stats pooled over the 4 parity planes.
        rs = jnp.sum(y2 * mask, axis=1, keepdims=True)       # (4*Cout, 1)
        rq = jnp.sum(y2 * y2 * mask, axis=1, keepdims=True)
        s2 = rs[0:cout] + rs[cout:2 * cout] + rs[2 * cout:3 * cout] + rs[3 * cout:4 * cout]
        q2 = rq[0:cout] + rq[cout:2 * cout] + rq[2 * cout:3 * cout] + rq[3 * cout:4 * cout]
        m2 = s2 * inv2
        v2 = q2 * inv2 - m2 * m2
        sc2 = g2_ref[...] * jax.lax.rsqrt(v2 + EPS)
        sh2 = be2_ref[...] - m2 * sc2
        sc2r = jnp.concatenate([sc2] * 4, axis=0)            # (4*Cout, 1)
        sh2r = jnp.concatenate([sh2] * 4, axis=0)

        # BN2 normalize + residual add + ReLU; one lane-dense (LT-wide) store
        # (review #5).  Padded-column garbage is sliced off outside.
        out_ref[...] = jnp.maximum(sc2r * y2 + sh2r + rp_ref[...], 0.0)

    def full(shape):
        nd = len(shape)
        return pl.BlockSpec(shape, lambda i: (0,) * nd)

    # Zero-padded (1 top / 2 bottom / 1 left / 1 right), channel-major,
    # batch-concatenated flat input + TAIL trailing zeros.
    xp = jnp.pad(x, ((0, 0), (0, 0), (1, 2), (1, 1)))
    xpf = jnp.pad(jnp.transpose(xp, (1, 0, 2, 3)).reshape(cin, lt),
                  ((0, 0), (0, tail)))

    out_flat = pl.pallas_call(
        kernel,
        out_shape=jax.ShapeDtypeStruct((4 * cout, lt), jnp.float32),
        grid=(1,),
        in_specs=[full((cin, lt + tail)),
                  full((cin, 9 * cin)),
                  full((4 * cout, 9 * cin)),
                  full((4 * cout, 9 * cin)),
                  full((4 * cout, 1)),
                  full((cin, 1)), full((cin, 1)),
                  full((cout, 1)), full((cout, 1))],
        out_specs=full((4 * cout, lt)),
        scratch_shapes=[pltpu.VMEM((9 * cin, lt), jnp.float32),
                        pltpu.VMEM((4 * cout, lt), jnp.float32)],
        compiler_params=pltpu.CompilerParams(
            dimension_semantics=("arbitrary",),
            vmem_limit_bytes=32 * 1024 * 1024),
    )(xpf, prep["w1f"], prep["w2p"], prep["w3p"], prep["b3p"],
      prep["g1"], prep["be1"], prep["g2"], prep["be2"])

    # Pixel-shuffle epilogue (XLA): rows are (a, b, cout), lanes are
    # (n, padded-row y, padded-col x) with the exact row stride wp; slice the
    # valid pixels, then interleave the parities into (N, Cout, 2H, 2W).
    o = out_flat.reshape(2, 2, cout, n, h + 3, wp)[:, :, :, :, :h, :w]
    return jnp.transpose(o, (3, 2, 4, 0, 5, 1)).reshape(n, cout, 2 * h, 2 * w)


# ------------------------------------------------------------- reference ------

def type2_reference(x, p):
    """Pure-JAX reference (identical semantics, keeps the conv biases)."""
    def conv(z, wgt, b):
        y = jax.lax.conv_general_dilated(
            z, wgt, (1, 1), [(1, 1), (1, 1)],
            dimension_numbers=("NCHW", "OIHW", "NCHW"))
        return y + b.reshape(1, -1, 1, 1)

    def bn(z, g, beta):
        m = jnp.mean(z, axis=(0, 2, 3), keepdims=True)
        v = jnp.mean(jnp.square(z - m), axis=(0, 2, 3), keepdims=True)
        return (z - m) * jax.lax.rsqrt(v + EPS) * g.reshape(1, -1, 1, 1) \
               + beta.reshape(1, -1, 1, 1)

    def up2(z):
        return jnp.repeat(jnp.repeat(z, 2, axis=2), 2, axis=3)

    y = bn(conv(x, p["w1"], p["b1"]), p["g1"], p["be1"])
    y = bn(conv(up2(y), p["w2"], p["b2"]), p["g2"], p["be2"])
    res = conv(up2(x), p["w3"], p["b3"])
    return jnp.maximum(y + res, 0.0)


# ---------------------------------------------------------------- params ------

def init_params(key, inp, out):
    ks = jax.random.split(key, 10)

    def conv_w(k, cin, cout):
        # PyTorch Conv2d weight layout (Cout, Cin, 3, 3).
        return 0.1 * jax.random.normal(k, (cout, cin, 3, 3), jnp.float32)

    return {
        "w1": conv_w(ks[0], inp, inp),
        "b1": 0.1 * jax.random.normal(ks[1], (inp,), jnp.float32),  # cancels in BN1
        "g1": 1.0 + 0.1 * jax.random.normal(ks[2], (inp,), jnp.float32),
        "be1": 0.1 * jax.random.normal(ks[3], (inp,), jnp.float32),
        "w2": conv_w(ks[4], inp, out),
        "b2": 0.1 * jax.random.normal(ks[5], (out,), jnp.float32),  # cancels in BN2
        "g2": 1.0 + 0.1 * jax.random.normal(ks[6], (out,), jnp.float32),
        "be2": 0.1 * jax.random.normal(ks[7], (out,), jnp.float32),
        "w3": conv_w(ks[8], inp, out),
        "b3": 0.1 * jax.random.normal(ks[9], (out,), jnp.float32),
    }


# ------------------------------------------------------------------ main ------

if __name__ == "__main__":
    inp, out = 4, 8
    key = jax.random.PRNGKey(0)
    kx, kp = jax.random.split(key)
    x = jax.random.normal(kx, (2, inp, 16, 16), jnp.float32)   # NCHW, like PyTorch
    params = init_params(kp, inp, out)

    prep = type2_prepare(params)                 # one-time weight folding
    fwd = jax.jit(type2_forward)
    y = jax.block_until_ready(fwd(x, prep))
    assert y.shape == (2, out, 32, 32), y.shape

    y_ref = type2_reference(x, params)
    err = float(jnp.max(jnp.abs(y - y_ref)))
    assert err < 3e-3, f"max abs error {err}"
    print("KERNEL_OK")
</pallas_src>

<mosaic_0001>
module attributes {stable_mosaic.version = 11 : i64} {
  func.func @kernel(%arg0: i32, %arg1: memref<4x722xf32, #tpu.memory_space<vmem>>, %arg2: memref<4x36xf32, #tpu.memory_space<vmem>>, %arg3: memref<32x36xf32, #tpu.memory_space<vmem>>, %arg4: memref<32x36xf32, #tpu.memory_space<vmem>>, %arg5: memref<32x1xf32, #tpu.memory_space<vmem>>, %arg6: memref<4x1xf32, #tpu.memory_space<vmem>>, %arg7: memref<4x1xf32, #tpu.memory_space<vmem>>, %arg8: memref<8x1xf32, #tpu.memory_space<vmem>>, %arg9: memref<8x1xf32, #tpu.memory_space<vmem>>, %arg10: memref<32x684xf32, #tpu.memory_space<vmem>>, %arg11: memref<36x684xf32, #tpu.memory_space<vmem>>, %arg12: memref<32x684xf32, #tpu.memory_space<vmem>>) attributes {dimension_semantics = [#tpu.dimension_semantics<arbitrary>], iteration_bounds = array<i64: 1>, scalar_prefetch = 0 : i64, scratch_operands = 2 : i64, tpu.core_type = #tpu.core_type<tc>, window_params = [{pipeline_mode = #tpu.pipeline_mode<synchronous>, transform_indices = @transform_0, window_bounds = array<i64: 4, 722>}, {pipeline_mode = #tpu.pipeline_mode<synchronous>, transform_indices = @transform_1, window_bounds = array<i64: 4, 36>}, {pipeline_mode = #tpu.pipeline_mode<synchronous>, transform_indices = @transform_2, window_bounds = array<i64: 32, 36>}, {pipeline_mode = #tpu.pipeline_mode<synchronous>, transform_indices = @transform_3, window_bounds = array<i64: 32, 36>}, {pipeline_mode = #tpu.pipeline_mode<synchronous>, transform_indices = @transform_4, window_bounds = array<i64: 32, 1>}, {pipeline_mode = #tpu.pipeline_mode<synchronous>, transform_indices = @transform_5, window_bounds = array<i64: 4, 1>}, {pipeline_mode = #tpu.pipeline_mode<synchronous>, transform_indices = @transform_6, window_bounds = array<i64: 4, 1>}, {pipeline_mode = #tpu.pipeline_mode<synchronous>, transform_indices = @transform_7, window_bounds = array<i64: 8, 1>}, {pipeline_mode = #tpu.pipeline_mode<synchronous>, transform_indices = @transform_8, window_bounds = array<i64: 8, 1>}, {pipeline_mode = #tpu.pipeline_mode<synchronous>, transform_indices = @transform_9, window_bounds = array<i64: 32, 684>}]} {
    %0 = tpu.iota {dimensions = array<i32: 1>} : vector<1x684xi32>
    %c342_i32 = arith.constant 342 : i32
    %c0_i32 = arith.constant 0 : i32
    %1 = arith.cmpi eq, %c342_i32, %c0_i32 : i32
    %c1_i32 = arith.constant 1 : i32
    %2 = arith.select %1, %c1_i32, %c342_i32 : i32
    %3 = vector.broadcast %2 : i32 to vector<1x684xi32>
    %4 = arith.remsi %0, %3 : vector<1x684xi32>
    %c0_i32_0 = arith.constant 0 : i32
    %5 = vector.broadcast %c0_i32_0 : i32 to vector<1x684xi32>
    %6 = arith.cmpi ne, %4, %5 : vector<1x684xi32>
    %c0_i32_1 = arith.constant 0 : i32
    %7 = vector.broadcast %c0_i32_1 : i32 to vector<1x684xi32>
    %8 = arith.cmpi slt, %4, %7 : vector<1x684xi32>
    %c0_i32_2 = arith.constant 0 : i32
    %9 = arith.cmpi slt, %2, %c0_i32_2 : i32
    %10 = vector.broadcast %9 : i1 to vector<1x684xi1>
    %11 = vector.broadcast %10 : vector<1x684xi1> to vector<1x684xi1>
    %12 = arith.xori %8, %11 : vector<1x684xi1>
    %13 = arith.andi %12, %6 : vector<1x684xi1>
    %14 = vector.broadcast %2 : i32 to vector<1x684xi32>
    %15 = arith.addi %4, %14 : vector<1x684xi32>
    %16 = arith.select %13, %15, %4 : vector<1x684xi1>, vector<1x684xi32>
    %c288_i32 = arith.constant 288 : i32
    %17 = vector.broadcast %c288_i32 : i32 to vector<1x684xi32>
    %18 = arith.cmpi slt, %16, %17 : vector<1x684xi32>
    %c18_i32 = arith.constant 18 : i32
    %c0_i32_3 = arith.constant 0 : i32
    %19 = arith.cmpi eq, %c18_i32, %c0_i32_3 : i32
    %c1_i32_4 = arith.constant 1 : i32
    %20 = arith.select %19, %c1_i32_4, %c18_i32 : i32
    %21 = vector.broadcast %20 : i32 to vector<1x684xi32>
    %22 = arith.remsi %16, %21 : vector<1x684xi32>
    %c0_i32_5 = arith.constant 0 : i32
    %23 = vector.broadcast %c0_i32_5 : i32 to vector<1x684xi32>
    %24 = arith.cmpi ne, %22, %23 : vector<1x684xi32>
    %c0_i32_6 = arith.constant 0 : i32
    %25 = vector.broadcast %c0_i32_6 : i32 to vector<1x684xi32>
    %26 = arith.cmpi slt, %22, %25 : vector<1x684xi32>
    %c0_i32_7 = arith.constant 0 : i32
    %27 = arith.cmpi slt, %20, %c0_i32_7 : i32
    %28 = vector.broadcast %27 : i1 to vector<1x684xi1>
    %29 = vector.broadcast %28 : vector<1x684xi1> to vector<1x684xi1>
    %30 = arith.xori %26, %29 : vector<1x684xi1>
    %31 = arith.andi %30, %24 : vector<1x684xi1>
    %32 = vector.broadcast %20 : i32 to vector<1x684xi32>
    %33 = arith.addi %22, %32 : vector<1x684xi32>
    %34 = arith.select %31, %33, %22 : vector<1x684xi1>, vector<1x684xi32>
    %c16_i32 = arith.constant 16 : i32
    %35 = vector.broadcast %c16_i32 : i32 to vector<1x684xi32>
    %36 = arith.cmpi slt, %34, %35 : vector<1x684xi32>
    %37 = arith.andi %18, %36 : vector<1x684xi1>
    %38 = arith.extui %37 : vector<1x684xi1> to vector<1x684xi32>
    %39 = arith.sitofp %38 : vector<1x684xi32> to vector<1x684xf32>
    %c0 = arith.constant 0 : index
    %c0_8 = arith.constant 0 : index
    %40 = vector.load %arg1[%c0, %c0_8] : memref<4x722xf32, #tpu.memory_space<vmem>>, vector<4x722xf32>
    %41 = vector.extract_strided_slice %40 {offsets = [0, 0], sizes = [4, 684], strides = [1, 1]} : vector<4x722xf32> to vector<4x684xf32>
    %c0_9 = arith.constant 0 : index
    %c0_10 = arith.constant 0 : index
    %42 = vector.load %arg11[%c0_9, %c0_10] : memref<36x684xf32, #tpu.memory_space<vmem>>, vector<4x684xf32>
    tpu.vector_store %arg11[%c0_9, %c0_10], %41 {strides = array<i32>} : memref<36x684xf32, #tpu.memory_space<vmem>>, vector<4x684xf32>,
    %43 = vector.extract_strided_slice %40 {offsets = [0, 1], sizes = [4, 684], strides = [1, 1]} : vector<4x722xf32> to vector<4x684xf32>
    %c4 = arith.constant 4 : index
    %c0_11 = arith.constant 0 : index
    %44 = vector.load %arg11[%c4, %c0_11] : memref<36x684xf32, #tpu.memory_space<vmem>>, vector<4x684xf32>
    tpu.vector_store %arg11[%c4, %c0_11], %43 {strides = array<i32>} : memref<36x684xf32, #tpu.memory_space<vmem>>, vector<4x684xf32>,
    %45 = vector.extract_strided_slice %40 {offsets = [0, 2], sizes = [4, 684], strides = [1, 1]} : vector<4x722xf32> to vector<4x684xf32>
    %c8 = arith.constant 8 : index
    %c0_12 = arith.constant 0 : index
    %46 = vector.load %arg11[%c8, %c0_12] : memref<36x684xf32, #tpu.memory_space<vmem>>, vector<4x684xf32>
    tpu.vector_store %arg11[%c8, %c0_12], %45 {strides = array<i32>} : memref<36x684xf32, #tpu.memory_space<vmem>>, vector<4x684xf32>,
    %47 = vector.extract_strided_slice %40 {offsets = [0, 18], sizes = [4, 684], strides = [1, 1]} : vector<4x722xf32> to vector<4x684xf32>
    %c12 = arith.constant 12 : index
    %c0_13 = arith.constant 0 : index
    %48 = vector.load %arg11[%c12, %c0_13] : memref<36x684xf32, #tpu.memory_space<vmem>>, vector<4x684xf32>
    tpu.vector_store %arg11[%c12, %c0_13], %47 {strides = array<i32>} : memref<36x684xf32, #tpu.memory_space<vmem>>, vector<4x684xf32>,
    %49 = vector.extract_strided_slice %40 {offsets = [0, 19], sizes = [4, 684], strides = [1, 1]} : vector<4x722xf32> to vector<4x684xf32>
    %c16 = arith.constant 16 : index
    %c0_14 = arith.constant 0 : index
    %50 = vector.load %arg11[%c16, %c0_14] : memref<36x684xf32, #tpu.memory_space<vmem>>, vector<4x684xf32>
    tpu.vector_store %arg11[%c16, %c0_14], %49 {strides = array<i32>} : memref<36x684xf32, #tpu.memory_space<vmem>>, vector<4x684xf32>,
    %51 = vector.extract_strided_slice %40 {offsets = [0, 20], sizes = [4, 684], strides = [1, 1]} : vector<4x722xf32> to vector<4x684xf32>
    %c20 = arith.constant 20 : index
    %c0_15 = arith.constant 0 : index
    %52 = vector.load %arg11[%c20, %c0_15] : memref<36x684xf32, #tpu.memory_space<vmem>>, vector<4x684xf32>
    tpu.vector_store %arg11[%c20, %c0_15], %51 {strides = array<i32>} : memref<36x684xf32, #tpu.memory_space<vmem>>, vector<4x684xf32>,
    %53 = vector.extract_strided_slice %40 {offsets = [0, 36], sizes = [4, 684], strides = [1, 1]} : vector<4x722xf32> to vector<4x684xf32>
    %c24 = arith.constant 24 : index
    %c0_16 = arith.constant 0 : index
    %54 = vector.load %arg11[%c24, %c0_16] : memref<36x684xf32, #tpu.memory_space<vmem>>, vector<4x684xf32>
    tpu.vector_store %arg11[%c24, %c0_16], %53 {strides = array<i32>} : memref<36x684xf32, #tpu.memory_space<vmem>>, vector<4x684xf32>,
    %55 = vector.extract_strided_slice %40 {offsets = [0, 37], sizes = [4, 684], strides = [1, 1]} : vector<4x722xf32> to vector<4x684xf32>
    %c28 = arith.constant 28 : index
    %c0_17 = arith.constant 0 : index
    %56 = vector.load %arg11[%c28, %c0_17] : memref<36x684xf32, #tpu.memory_space<vmem>>, vector<4x684xf32>
    tpu.vector_store %arg11[%c28, %c0_17], %55 {strides = array<i32>} : memref<36x684xf32, #tpu.memory_space<vmem>>, vector<4x684xf32>,
    %57 = vector.extract_strided_slice %40 {offsets = [0, 38], sizes = [4, 684], strides = [1, 1]} : vector<4x722xf32> to vector<4x684xf32>
    %c32 = arith.constant 32 : index
    %c0_18 = arith.constant 0 : index
    %58 = vector.load %arg11[%c32, %c0_18] : memref<36x684xf32, #tpu.memory_space<vmem>>, vector<4x684xf32>
    tpu.vector_store %arg11[%c32, %c0_18], %57 {strides = array<i32>} : memref<36x684xf32, #tpu.memory_space<vmem>>, vector<4x684xf32>,
    %c0_19 = arith.constant 0 : index
    %c0_20 = arith.constant 0 : index
    %59 = vector.load %arg4[%c0_19, %c0_20] : memref<32x36xf32, #tpu.memory_space<vmem>>, vector<32x36xf32>
    %c0_21 = arith.constant 0 : index
    %c0_22 = arith.constant 0 : index
    %60 = vector.load %arg11[%c0_21, %c0_22] : memref<36x684xf32, #tpu.memory_space<vmem>>, vector<36x684xf32>
    %cst = arith.constant dense<0.000000e+00> : vector<32x684xf32>
    %61 = tpu.matmul %59, %60, %cst {dimension_numbers = #tpu.dot_dimension_numbers<[1], [0], [0], [1], [0, 0, 1, 1], [], []>} : vector<32x36xf32>, vector<36x684xf32>, vector<32x684xf32> -> vector<32x684xf32>
    %c0_23 = arith.constant 0 : index
    %c0_24 = arith.constant 0 : index
    %62 = vector.load %arg5[%c0_23, %c0_24] : memref<32x1xf32, #tpu.memory_space<vmem>>, vector<32x1xf32>
    %63 = vector.broadcast %62 : vector<32x1xf32> to vector<32x684xf32>
    %64 = arith.addf %61, %63 : vector<32x684xf32>
    %c0_25 = arith.constant 0 : index
    %c0_26 = arith.constant 0 : index
    %65 = vector.load %arg12[%c0_25, %c0_26] : memref<32x684xf32, #tpu.memory_space<vmem>>, vector<32x684xf32>
    tpu.vector_store %arg12[%c0_25, %c0_26], %64 {strides = array<i32>} : memref<32x684xf32, #tpu.memory_space<vmem>>, vector<32x684xf32>,
    %c0_27 = arith.constant 0 : index
    %c0_28 = arith.constant 0 : index
    %66 = vector.load %arg2[%c0_27, %c0_28] : memref<4x36xf32, #tpu.memory_space<vmem>>, vector<4x36xf32>
    %c0_29 = arith.constant 0 : index
    %c0_30 = arith.constant 0 : index
    %67 = vector.load %arg11[%c0_29, %c0_30] : memref<36x684xf32, #tpu.memory_space<vmem>>, vector<36x684xf32>
    %cst_31 = arith.constant dense<0.000000e+00> : vector<4x684xf32>
    %68 = tpu.matmul %66, %67, %cst_31 {dimension_numbers = #tpu.dot_dimension_numbers<[1], [0], [0], [1], [0, 0, 1, 1], [], []>} : vector<4x36xf32>, vector<36x684xf32>, vector<4x684xf32> -> vector<4x684xf32>
    %69 = vector.broadcast %39 : vector<1x684xf32> to vector<4x684xf32>
    %70 = arith.mulf %68, %69 : vector<4x684xf32>
    %cst_32 = arith.constant dense<0.000000e+00> : vector<4xf32>
    %71 = vector.multi_reduction <add>, %70, %cst_32 [1] : vector<4x684xf32> to vector<4xf32>
    %72 = vector.shape_cast %71 : vector<4xf32> to vector<4x1xf32>
    %73 = arith.mulf %68, %68 : vector<4x684xf32>
    %74 = vector.broadcast %39 : vector<1x684xf32> to vector<4x684xf32>
    %75 = arith.mulf %73, %74 : vector<4x684xf32>
    %cst_33 = arith.constant dense<0.000000e+00> : vector<4xf32>
    %76 = vector.multi_reduction <add>, %75, %cst_33 [1] : vector<4x684xf32> to vector<4xf32>
    %77 = vector.shape_cast %76 : vector<4xf32> to vector<4x1xf32>
    %cst_34 = arith.constant 0.001953125 : f32
    %78 = vector.broadcast %cst_34 : f32 to vector<4x1xf32>
    %79 = arith.mulf %72, %78 : vector<4x1xf32>
    %cst_35 = arith.constant 0.001953125 : f32
    %80 = vector.broadcast %cst_35 : f32 to vector<4x1xf32>
    %81 = arith.mulf %77, %80 : vector<4x1xf32>
    %82 = arith.mulf %79, %79 : vector<4x1xf32>
    %83 = arith.subf %81, %82 : vector<4x1xf32>
    %c0_36 = arith.constant 0 : index
    %c0_37 = arith.constant 0 : index
    %84 = vector.load %arg6[%c0_36, %c0_37] : memref<4x1xf32, #tpu.memory_space<vmem>>, vector<4x1xf32>
    %cst_38 = arith.constant 9.99999974E-6 : f32
    %85 = vector.broadcast %cst_38 : f32 to vector<4x1xf32>
    %86 = arith.addf %83, %85 : vector<4x1xf32>
    %87 = math.rsqrt %86 : vector<4x1xf32>
    %88 = arith.mulf %84, %87 : vector<4x1xf32>
    %c0_39 = arith.constant 0 : index
    %c0_40 = arith.constant 0 : index
    %89 = vector.load %arg7[%c0_39, %c0_40] : memref<4x1xf32, #tpu.memory_space<vmem>>, vector<4x1xf32>
    %90 = arith.mulf %79, %88 : vector<4x1xf32>
    %91 = arith.subf %89, %90 : vector<4x1xf32>
    %92 = vector.broadcast %88 : vector<4x1xf32> to vector<4x684xf32>
    %93 = arith.mulf %92, %68 : vector<4x684xf32>
    %94 = vector.broadcast %91 : vector<4x1xf32> to vector<4x684xf32>
    %95 = arith.addf %93, %94 : vector<4x684xf32>
    %96 = vector.broadcast %39 : vector<1x684xf32> to vector<4x684xf32>
    %97 = arith.mulf %95, %96 : vector<4x684xf32>
    %cst_41 = arith.constant 0.000000e+00 : f32
    %98 = vector.broadcast %cst_41 : f32 to vector<4x19xf32>
    %99 = tpu.concatenate %98, %97, %98 in 1 : vector<4x19xf32>, vector<4x684xf32>, vector<4x19xf32> -> vector<4x722xf32>
    %100 = vector.extract_strided_slice %99 {offsets = [0, 0], sizes = [4, 684], strides = [1, 1]} : vector<4x722xf32> to vector<4x684xf32>
    %c0_42 = arith.constant 0 : index
    %c0_43 = arith.constant 0 : index
    %101 = vector.load %arg11[%c0_42, %c0_43] : memref<36x684xf32, #tpu.memory_space<vmem>>, vector<4x684xf32>
    tpu.vector_store %arg11[%c0_42, %c0_43], %100 {strides = array<i32>} : memref<36x684xf32, #tpu.memory_space<vmem>>, vector<4x684xf32>,
    %102 = vector.extract_strided_slice %99 {offsets = [0, 1], sizes = [4, 684], strides = [1, 1]} : vector<4x722xf32> to vector<4x684xf32>
    %c4_44 = arith.constant 4 : index
    %c0_45 = arith.constant 0 : index
    %103 = vector.load %arg11[%c4_44, %c0_45] : memref<36x684xf32, #tpu.memory_space<vmem>>, vector<4x684xf32>
    tpu.vector_store %arg11[%c4_44, %c0_45], %102 {strides = array<i32>} : memref<36x684xf32, #tpu.memory_space<vmem>>, vector<4x684xf32>,
    %104 = vector.extract_strided_slice %99 {offsets = [0, 2], sizes = [4, 684], strides = [1, 1]} : vector<4x722xf32> to vector<4x684xf32>
    %c8_46 = arith.constant 8 : index
    %c0_47 = arith.constant 0 : index
    %105 = vector.load %arg11[%c8_46, %c0_47] : memref<36x684xf32, #tpu.memory_space<vmem>>, vector<4x684xf32>
    tpu.vector_store %arg11[%c8_46, %c0_47], %104 {strides = array<i32>} : memref<36x684xf32, #tpu.memory_space<vmem>>, vector<4x684xf32>,
    %106 = vector.extract_strided_slice %99 {offsets = [0, 18], sizes = [4, 684], strides = [1, 1]} : vector<4x722xf32> to vector<4x684xf32>
    %c12_48 = arith.constant 12 : index
    %c0_49 = arith.constant 0 : index
    %107 = vector.load %arg11[%c12_48, %c0_49] : memref<36x684xf32, #tpu.memory_space<vmem>>, vector<4x684xf32>
    tpu.vector_store %arg11[%c12_48, %c0_49], %106 {strides = array<i32>} : memref<36x684xf32, #tpu.memory_space<vmem>>, vector<4x684xf32>,
    %108 = vector.extract_strided_slice %99 {offsets = [0, 19], sizes = [4, 684], strides = [1, 1]} : vector<4x722xf32> to vector<4x684xf32>
    %c16_50 = arith.constant 16 : index
    %c0_51 = arith.constant 0 : index
    %109 = vector.load %arg11[%c16_50, %c0_51] : memref<36x684xf32, #tpu.memory_space<vmem>>, vector<4x684xf32>
    tpu.vector_store %arg11[%c16_50, %c0_51], %108 {strides = array<i32>} : memref<36x684xf32, #tpu.memory_space<vmem>>, vector<4x684xf32>,
    %110 = vector.extract_strided_slice %99 {offsets = [0, 20], sizes = [4, 684], strides = [1, 1]} : vector<4x722xf32> to vector<4x684xf32>
    %c20_52 = arith.constant 20 : index
    %c0_53 = arith.constant 0 : index
    %111 = vector.load %arg11[%c20_52, %c0_53] : memref<36x684xf32, #tpu.memory_space<vmem>>, vector<4x684xf32>
    tpu.vector_store %arg11[%c20_52, %c0_53], %110 {strides = array<i32>} : memref<36x684xf32, #tpu.memory_space<vmem>>, vector<4x684xf32>,
    %112 = vector.extract_strided_slice %99 {offsets = [0, 36], sizes = [4, 684], strides = [1, 1]} : vector<4x722xf32> to vector<4x684xf32>
    %c24_54 = arith.constant 24 : index
    %c0_55 = arith.constant 0 : index
    %113 = vector.load %arg11[%c24_54, %c0_55] : memref<36x684xf32, #tpu.memory_space<vmem>>, vector<4x684xf32>
    tpu.vector_store %arg11[%c24_54, %c0_55], %112 {strides = array<i32>} : memref<36x684xf32, #tpu.memory_space<vmem>>, vector<4x684xf32>,
    %114 = vector.extract_strided_slice %99 {offsets = [0, 37], sizes = [4, 684], strides = [1, 1]} : vector<4x722xf32> to vector<4x684xf32>
    %c28_56 = arith.constant 28 : index
    %c0_57 = arith.constant 0 : index
    %115 = vector.load %arg11[%c28_56, %c0_57] : memref<36x684xf32, #tpu.memory_space<vmem>>, vector<4x684xf32>
    tpu.vector_store %arg11[%c28_56, %c0_57], %114 {strides = array<i32>} : memref<36x684xf32, #tpu.memory_space<vmem>>, vector<4x684xf32>,
    %116 = vector.extract_strided_slice %99 {offsets = [0, 38], sizes = [4, 684], strides = [1, 1]} : vector<4x722xf32> to vector<4x684xf32>
    %c32_58 = arith.constant 32 : index
    %c0_59 = arith.constant 0 : index
    %117 = vector.load %arg11[%c32_58, %c0_59] : memref<36x684xf32, #tpu.memory_space<vmem>>, vector<4x684xf32>
    tpu.vector_store %arg11[%c32_58, %c0_59], %116 {strides = array<i32>} : memref<36x684xf32, #tpu.memory_space<vmem>>, vector<4x684xf32>,
    %c0_60 = arith.constant 0 : index
    %c0_61 = arith.constant 0 : index
    %118 = vector.load %arg3[%c0_60, %c0_61] : memref<32x36xf32, #tpu.memory_space<vmem>>, vector<32x36xf32>
    %c0_62 = arith.constant 0 : index
    %c0_63 = arith.constant 0 : index
    %119 = vector.load %arg11[%c0_62, %c0_63] : memref<36x684xf32, #tpu.memory_space<vmem>>, vector<36x684xf32>
    %cst_64 = arith.constant dense<0.000000e+00> : vector<32x684xf32>
    %120 = tpu.matmul %118, %119, %cst_64 {dimension_numbers = #tpu.dot_dimension_numbers<[1], [0], [0], [1], [0, 0, 1, 1], [], []>} : vector<32x36xf32>, vector<36x684xf32>, vector<32x684xf32> -> vector<32x684xf32>
    %121 = vector.broadcast %39 : vector<1x684xf32> to vector<32x684xf32>
    %122 = arith.mulf %120, %121 : vector<32x684xf32>
    %cst_65 = arith.constant dense<0.000000e+00> : vector<32xf32>
    %123 = vector.multi_reduction <add>, %122, %cst_65 [1] : vector<32x684xf32> to vector<32xf32>
    %124 = vector.shape_cast %123 : vector<32xf32> to vector<32x1xf32>
    %125 = arith.mulf %120, %120 : vector<32x684xf32>
    %126 = vector.broadcast %39 : vector<1x684xf32> to vector<32x684xf32>
    %127 = arith.mulf %125, %126 : vector<32x684xf32>
    %cst_66 = arith.constant dense<0.000000e+00> : vector<32xf32>
    %128 = vector.multi_reduction <add>, %127, %cst_66 [1] : vector<32x684xf32> to vector<32xf32>
    %129 = vector.shape_cast %128 : vector<32xf32> to vector<32x1xf32>
    %130 = vector.extract_strided_slice %124 {offsets = [0, 0], sizes = [8, 1], strides = [1, 1]} : vector<32x1xf32> to vector<8x1xf32>
    %131 = vector.extract_strided_slice %124 {offsets = [8, 0], sizes = [8, 1], strides = [1, 1]} : vector<32x1xf32> to vector<8x1xf32>
    %132 = arith.addf %130, %131 : vector<8x1xf32>
    %133 = vector.extract_strided_slice %124 {offsets = [16, 0], sizes = [8, 1], strides = [1, 1]} : vector<32x1xf32> to vector<8x1xf32>
    %134 = arith.addf %132, %133 : vector<8x1xf32>
    %135 = vector.extract_strided_slice %124 {offsets = [24, 0], sizes = [8, 1], strides = [1, 1]} : vector<32x1xf32> to vector<8x1xf32>
    %136 = arith.addf %134, %135 : vector<8x1xf32>
    %137 = vector.extract_strided_slice %129 {offsets = [0, 0], sizes = [8, 1], strides = [1, 1]} : vector<32x1xf32> to vector<8x1xf32>
    %138 = vector.extract_strided_slice %129 {offsets = [8, 0], sizes = [8, 1], strides = [1, 1]} : vector<32x1xf32> to vector<8x1xf32>
    %139 = arith.addf %137, %138 : vector<8x1xf32>
    %140 = vector.extract_strided_slice %129 {offsets = [16, 0], sizes = [8, 1], strides = [1, 1]} : vector<32x1xf32> to vector<8x1xf32>
    %141 = arith.addf %139, %140 : vector<8x1xf32>
    %142 = vector.extract_strided_slice %129 {offsets = [24, 0], sizes = [8, 1], strides = [1, 1]} : vector<32x1xf32> to vector<8x1xf32>
    %143 = arith.addf %141, %142 : vector<8x1xf32>
    %cst_67 = arith.constant 4.8828125E-4 : f32
    %144 = vector.broadcast %cst_67 : f32 to vector<8x1xf32>
    %145 = arith.mulf %136, %144 : vector<8x1xf32>
    %cst_68 = arith.constant 4.8828125E-4 : f32
    %146 = vector.broadcast %cst_68 : f32 to vector<8x1xf32>
    %147 = arith.mulf %143, %146 : vector<8x1xf32>
    %148 = arith.mulf %145, %145 : vector<8x1xf32>
    %149 = arith.subf %147, %148 : vector<8x1xf32>
    %c0_69 = arith.constant 0 : index
    %c0_70 = arith.constant 0 : index
    %150 = vector.load %arg8[%c0_69, %c0_70] : memref<8x1xf32, #tpu.memory_space<vmem>>, vector<8x1xf32>
    %cst_71 = arith.constant 9.99999974E-6 : f32
    %151 = vector.broadcast %cst_71 : f32 to vector<8x1xf32>
    %152 = arith.addf %149, %151 : vector<8x1xf32>
    %153 = math.rsqrt %152 : vector<8x1xf32>
    %154 = arith.mulf %150, %153 : vector<8x1xf32>
    %c0_72 = arith.constant 0 : index
    %c0_73 = arith.constant 0 : index
    %155 = vector.load %arg9[%c0_72, %c0_73] : memref<8x1xf32, #tpu.memory_space<vmem>>, vector<8x1xf32>
    %156 = arith.mulf %145, %154 : vector<8x1xf32>
    %157 = arith.subf %155, %156 : vector<8x1xf32>
    %158 = tpu.concatenate %154, %154, %154, %154 in 0 : vector<8x1xf32>, vector<8x1xf32>, vector<8x1xf32>, vector<8x1xf32> -> vector<32x1xf32>
    %159 = tpu.concatenate %157, %157, %157, %157 in 0 : vector<8x1xf32>, vector<8x1xf32>, vector<8x1xf32>, vector<8x1xf32> -> vector<32x1xf32>
    %160 = vector.broadcast %158 : vector<32x1xf32> to vector<32x684xf32>
    %161 = arith.mulf %160, %120 : vector<32x684xf32>
    %162 = vector.broadcast %159 : vector<32x1xf32> to vector<32x684xf32>
    %163 = arith.addf %161, %162 : vector<32x684xf32>
    %c0_74 = arith.constant 0 : index
    %c0_75 = arith.constant 0 : index
    %164 = vector.load %arg12[%c0_74, %c0_75] : memref<32x684xf32, #tpu.memory_space<vmem>>, vector<32x684xf32>
    %165 = arith.addf %163, %164 : vector<32x684xf32>
    %cst_76 = arith.constant 0.000000e+00 : f32
    %166 = vector.broadcast %cst_76 : f32 to vector<32x684xf32>
    %167 = arith.maximumf %165, %166 : vector<32x684xf32>
    %c0_77 = arith.constant 0 : index
    %c0_78 = arith.constant 0 : index
    %168 = vector.load %arg10[%c0_77, %c0_78] : memref<32x684xf32, #tpu.memory_space<vmem>>, vector<32x684xf32>
    tpu.vector_store %arg10[%c0_77, %c0_78], %167 {strides = array<i32>} : memref<32x684xf32, #tpu.memory_space<vmem>>, vector<32x684xf32>,
    return
  }
  func.func @transform_0(%arg0: i32) -> (i32, i32) {
    %c0_i32 = arith.constant 0 : i32
    %c0_i32_0 = arith.constant 0 : i32
    %c0_i32_1 = arith.constant 0 : i32
    return %c0_i32, %c0_i32_0 : i32, i32
  }
  func.func @transform_1(%arg0: i32) -> (i32, i32) {
    %c0_i32 = arith.constant 0 : i32
    %c0_i32_0 = arith.constant 0 : i32
    %c0_i32_1 = arith.constant 0 : i32
    return %c0_i32, %c0_i32_0 : i32, i32
  }
  func.func @transform_2(%arg0: i32) -> (i32, i32) {
    %c0_i32 = arith.constant 0 : i32
    %c0_i32_0 = arith.constant 0 : i32
    %c0_i32_1 = arith.constant 0 : i32
    return %c0_i32, %c0_i32_0 : i32, i32
  }
  func.func @transform_3(%arg0: i32) -> (i32, i32) {
    %c0_i32 = arith.constant 0 : i32
    %c0_i32_0 = arith.constant 0 : i32
    %c0_i32_1 = arith.constant 0 : i32
    return %c0_i32, %c0_i32_0 : i32, i32
  }
  func.func @transform_4(%arg0: i32) -> (i32, i32) {
    %c0_i32 = arith.constant 0 : i32
    %c0_i32_0 = arith.constant 0 : i32
    %c0_i32_1 = arith.constant 0 : i32
    return %c0_i32, %c0_i32_0 : i32, i32
  }
  func.func @transform_5(%arg0: i32) -> (i32, i32) {
    %c0_i32 = arith.constant 0 : i32
    %c0_i32_0 = arith.constant 0 : i32
    %c0_i32_1 = arith.constant 0 : i32
    return %c0_i32, %c0_i32_0 : i32, i32
  }
  func.func @transform_6(%arg0: i32) -> (i32, i32) {
    %c0_i32 = arith.constant 0 : i32
    %c0_i32_0 = arith.constant 0 : i32
    %c0_i32_1 = arith.constant 0 : i32
    return %c0_i32, %c0_i32_0 : i32, i32
  }
  func.func @transform_7(%arg0: i32) -> (i32, i32) {
    %c0_i32 = arith.constant 0 : i32
    %c0_i32_0 = arith.constant 0 : i32
    %c0_i32_1 = arith.constant 0 : i32
    return %c0_i32, %c0_i32_0 : i32, i32
  }
  func.func @transform_8(%arg0: i32) -> (i32, i32) {
    %c0_i32 = arith.constant 0 : i32
    %c0_i32_0 = arith.constant 0 : i32
    %c0_i32_1 = arith.constant 0 : i32
    return %c0_i32, %c0_i32_0 : i32, i32
  }
  func.func @transform_9(%arg0: i32) -> (i32, i32) {
    %c0_i32 = arith.constant 0 : i32
    %c0_i32_0 = arith.constant 0 : i32
    %c0_i32_1 = arith.constant 0 : i32
    return %c0_i32, %c0_i32_0 : i32, i32
  }
}

</mosaic_0001>

<llo_original>
// kernel: type2_forward.1
$region0: #{type2_forward.1}
  #allocation0 [shape = 'u32[]', space=smem, size = 0x4, offset = 0x4, fixed_abs, tag = 'smem constant byte address 0x4 - core index']
  #allocation1 [shape = 'u32[144,128]{1,0:T(1,128)}', space=vmem, size = 0x12000, scoped, tag = 'internal scratch']
  #allocation2 [shape = 'f32[36,684]{1,0:T(8,128)}', space=vmem, size = 0x1e000, scoped, tag = 'scratch operand']
  #allocation3 [shape = 'f32[32,684]{1,0:T(8,128)}', space=vmem, size = 0x18000, scoped, tag = 'scratch operand']
  %s0 = inlined_call_operand.vmem [shape: f32[4,722], index: 0, kind: input, shape index: {}]
  %s1 = inlined_call_operand.vmem [shape: f32[4,36], index: 1, kind: input, shape index: {}]
  %s2 = inlined_call_operand.vmem [shape: f32[32,36], index: 2, kind: input, shape index: {}]
  %s3 = inlined_call_operand.vmem [shape: f32[32,36], index: 3, kind: input, shape index: {}]
  %s4 = inlined_call_operand.vmem [shape: f32[32,1], index: 4, kind: input, shape index: {}]
  %s5 = inlined_call_operand.vmem [shape: f32[4,1], index: 5, kind: input, shape index: {}]
  %s6 = inlined_call_operand.vmem [shape: f32[4,1], index: 6, kind: input, shape index: {}]
  %s7 = inlined_call_operand.vmem [shape: f32[8,1], index: 7, kind: input, shape index: {}]
  %s8 = inlined_call_operand.vmem [shape: f32[8,1], index: 8, kind: input, shape index: {}]
  %s9 = inlined_call_operand.vmem [shape: f32[32,684], index: 9, kind: output, shape index: {}]
  %s10 = sld [smem:[#allocation0]]
  $region46: #{type2_forward.1} parent=0
    _
  %s12 = ssub.s32 1, %s10
  %s13 = scalar_select 0, %s12, %s10
  // Predicated region
  $region2: #{type2_forward.1} parent=0 // pred_check
    _
  $region3: #{type2_forward.1} parent=0 // pred_check_branch
    %15 = sbr.rel (0) target = $region5
  $region4: #{type2_forward.1} parent=0 // pred_region
    _
  $region5: #{type2_forward.1} parent=0 // pred_fallthru
    _
  // Predicated region
  $region6: #{type2_forward.1} parent=0 // pred_check
    _
  $region7: #{type2_forward.1} parent=0 // pred_check_branch
    %17 = sbr.rel (0) target = $region9
  $region8: #{type2_forward.1} parent=0 // pred_region
    _
  $region9: #{type2_forward.1} parent=0 // pred_fallthru
    _
  // Predicated region
  $region10: #{type2_forward.1} parent=0 // pred_check
    _
  $region11: #{type2_forward.1} parent=0 // pred_check_branch
    %19 = sbr.rel (0) target = $region13
  $region12: #{type2_forward.1} parent=0 // pred_region
    _
  $region13: #{type2_forward.1} parent=0 // pred_fallthru
    _
  // Predicated region
  $region14: #{type2_forward.1} parent=0 // pred_check
    _
  $region15: #{type2_forward.1} parent=0 // pred_check_branch
    %21 = sbr.rel (0) target = $region17
  $region16: #{type2_forward.1} parent=0 // pred_region
    _
  $region17: #{type2_forward.1} parent=0 // pred_fallthru
    _
  // Predicated region
  $region18: #{type2_forward.1} parent=0 // pred_check
    _
  $region19: #{type2_forward.1} parent=0 // pred_check_branch
    %23 = sbr.rel (0) target = $region21
  $region20: #{type2_forward.1} parent=0 // pred_region
    _
  $region21: #{type2_forward.1} parent=0 // pred_fallthru
    _
  // Predicated region
  $region22: #{type2_forward.1} parent=0 // pred_check
    _
  $region23: #{type2_forward.1} parent=0 // pred_check_branch
    %25 = sbr.rel (0) target = $region25
  $region24: #{type2_forward.1} parent=0 // pred_region
    _
  $region25: #{type2_forward.1} parent=0 // pred_fallthru
    _
  // Predicated region
  $region26: #{type2_forward.1} parent=0 // pred_check
    _
  $region27: #{type2_forward.1} parent=0 // pred_check_branch
    %27 = sbr.rel (0) target = $region29
  $region28: #{type2_forward.1} parent=0 // pred_region
    _
  $region29: #{type2_forward.1} parent=0 // pred_fallthru
    _
  // Predicated region
  $region30: #{type2_forward.1} parent=0 // pred_check
    _
  $region31: #{type2_forward.1} parent=0 // pred_check_branch
    %29 = sbr.rel (0) target = $region33
  $region32: #{type2_forward.1} parent=0 // pred_region
    _
  $region33: #{type2_forward.1} parent=0 // pred_fallthru
    _
  // Predicated region
  $region34: #{type2_forward.1} parent=0 // pred_check
    _
  $region35: #{type2_forward.1} parent=0 // pred_check_branch
    %31 = sbr.rel (0) target = $region37
  $region36: #{type2_forward.1} parent=0 // pred_region
    _
  $region37: #{type2_forward.1} parent=0 // pred_fallthru
    _
  %v32 = vlaneseq
  %v33 = vand.u32 %v32, 127
  %v34 = vadd.s32 %v33, 128
  %v35 = vadd.s32 %v33, 256
  %v36 = vadd.s32 %v33, 384
  %v37 = vadd.s32 %v33, 512
  %v38 = vadd.s32 %v33, 640
  %vm39 = vcmp.lt.s32.totalorder %v33, 0
  %v40 = vsub.s32 0, %v33
  %v41 = vsel %vm39, %v40, %v33
  %v42 = vmul.u32.u64.compose %v41, 3214946280
  %v43 = vextract.low.u32 %v42
  %v44 = vextract.high.u32 %v42
  %vm45 = vc.u32 %v43, 3214946280
  %v46 = vsel %vm45, 1, 0
  %v47 = vadd.s32 %v44, %v46
  %v48 = vshrl.u32 %v47, 8
  %v49 = vmul.u32 %v48, 342
  %v50 = vsub.s32 %v41, %v49
  %v51 = vsub.s32 0, %v50
  %v52 = vsel %vm39, %v51, %v50
  %vm53 = vcmp.lt.s32.totalorder %v34, 0
  %v54 = vsub.s32 0, %v34
  %v55 = vsel %vm53, %v54, %v34
  %v56 = vmul.u32.u64.compose %v55, 3214946280
  %v57 = vextract.low.u32 %v56
  %v58 = vextract.high.u32 %v56
  %vm59 = vc.u32 %v57, 3214946280
  %v60 = vsel %vm59, 1, 0
  %v61 = vadd.s32 %v58, %v60
  %v62 = vshrl.u32 %v61, 8
  %v63 = vmul.u32 %v62, 342
  %v64 = vsub.s32 %v55, %v63
  %v65 = vsub.s32 0, %v64
  %v66 = vsel %vm53, %v65, %v64
  %vm67 = vcmp.lt.s32.totalorder %v35, 0
  %v68 = vsub.s32 0, %v35
  %v69 = vsel %vm67, %v68, %v35
  %v70 = vmul.u32.u64.compose %v69, 3214946280
  %v71 = vextract.low.u32 %v70
  %v72 = vextract.high.u32 %v70
  %vm73 = vc.u32 %v71, 3214946280
  %v74 = vsel %vm73, 1, 0
  %v75 = vadd.s32 %v72, %v74
  %v76 = vshrl.u32 %v75, 8
  %v77 = vmul.u32 %v76, 342
  %v78 = vsub.s32 %v69, %v77
  %v79 = vsub.s32 0, %v78
  %v80 = vsel %vm67, %v79, %v78
  %vm81 = vcmp.lt.s32.totalorder %v36, 0
  %v82 = vsub.s32 0, %v36
  %v83 = vsel %vm81, %v82, %v36
  %v84 = vmul.u32.u64.compose %v83, 3214946280
  %v85 = vextract.low.u32 %v84
  %v86 = vextract.high.u32 %v84
  %vm87 = vc.u32 %v85, 3214946280
  %v88 = vsel %vm87, 1, 0
  %v89 = vadd.s32 %v86, %v88
  %v90 = vshrl.u32 %v89, 8
  %v91 = vmul.u32 %v90, 342
  %v92 = vsub.s32 %v83, %v91
  %v93 = vsub.s32 0, %v92
  %v94 = vsel %vm81, %v93, %v92
  %vm95 = vcmp.lt.s32.totalorder %v37, 0
  %v96 = vsub.s32 0, %v37
  %v97 = vsel %vm95, %v96, %v37
  %v98 = vmul.u32.u64.compose %v97, 3214946280
  %v99 = vextract.low.u32 %v98
  %v100 = vextract.high.u32 %v98
  %vm101 = vc.u32 %v99, 3214946280
  %v102 = vsel %vm101, 1, 0
  %v103 = vadd.s32 %v100, %v102
  %v104 = vshrl.u32 %v103, 8
  %v105 = vmul.u32 %v104, 342
  %v106 = vsub.s32 %v97, %v105
  %v107 = vsub.s32 0, %v106
  %v108 = vsel %vm95, %v107, %v106
  %vm109 = vcmp.lt.s32.totalorder %v38, 0
  %v110 = vsub.s32 0, %v38
  %v111 = vsel %vm109, %v110, %v38
  %v112 = vmul.u32.u64.compose %v111, 3214946280
  %v113 = vextract.low.u32 %v112
  %v114 = vextract.high.u32 %v112
  %vm115 = vc.u32 %v113, 3214946280
  %v116 = vsel %vm115, 1, 0
  %v117 = vadd.s32 %v114, %v116
  %v118 = vshrl.u32 %v117, 8
  %v119 = vmul.u32 %v118, 342
  %v120 = vsub.s32 %v111, %v119
  %v121 = vsub.s32 0, %v120
  %v122 = vsel %vm109, %v121, %v120
  %vm123 = vcmp.ne.s32.totalorder %v52, 0
  %vm124 = vcmp.ne.s32.totalorder %v66, 0
  %vm125 = vcmp.ne.s32.totalorder %v80, 0
  %vm126 = vcmp.ne.s32.totalorder %v94, 0
  %vm127 = vcmp.ne.s32.totalorder %v108, 0
  %vm128 = vcmp.ne.s32.totalorder %v122, 0
  %vm129 = vcmp.lt.s32.totalorder %v52, 0
  %vm130 = vcmp.lt.s32.totalorder %v66, 0
  %vm131 = vcmp.lt.s32.totalorder %v80, 0
  %vm132 = vcmp.lt.s32.totalorder %v94, 0
  %vm133 = vcmp.lt.s32.totalorder %v108, 0
  %vm134 = vcmp.lt.s32.totalorder %v122, 0
  %vm135 = vmand %vm129, %vm123
  %vm136 = vmand %vm130, %vm124
  %vm137 = vmand %vm131, %vm125
  %vm138 = vmand %vm132, %vm126
  %vm139 = vmand %vm133, %vm127
  %vm140 = vmand %vm134, %vm128
  %v141 = vadd.s32 %v52, 342
  %v142 = vadd.s32 %v66, 342
  %v143 = vadd.s32 %v80, 342
  %v144 = vadd.s32 %v94, 342
  %v145 = vadd.s32 %v108, 342
  %v146 = vadd.s32 %v122, 342
  %v147 = vsel %vm135, %v141, %v52
  %v148 = vsel %vm136, %v142, %v66
  %v149 = vsel %vm137, %v143, %v80
  %v150 = vsel %vm138, %v144, %v94
  %v151 = vsel %vm139, %v145, %v108
  %v152 = vsel %vm140, %v146, %v122
  %vm153 = vcmp.lt.s32.totalorder %v147, 288
  %vm154 = vcmp.lt.s32.totalorder %v148, 288
  %vm155 = vcmp.lt.s32.totalorder %v149, 288
  %vm156 = vcmp.lt.s32.totalorder %v150, 288
  %vm157 = vcmp.lt.s32.totalorder %v151, 288
  %vm158 = vcmp.lt.s32.totalorder %v152, 288
  %vm159 = vcmp.lt.s32.totalorder %v147, 0
  %v160 = vsub.s32 0, %v147
  %v161 = vsel %vm159, %v160, %v147
  %v162 = vmul.u32.u64.compose %v161, 3817748708
  %v163 = vextract.low.u32 %v162
  %v164 = vextract.high.u32 %v162
  %v165 = vshrl.u32 %v164, 4
  %v166 = vmul.u32 %v165, 18
  %v167 = vsub.s32 %v161, %v166
  %v168 = vsub.s32 0, %v167
  %v169 = vsel %vm159, %v168, %v167
  %vm170 = vcmp.lt.s32.totalorder %v148, 0
  %v171 = vsub.s32 0, %v148
  %v172 = vsel %vm170, %v171, %v148
  %v173 = vmul.u32.u64.compose %v172, 3817748708
  %v174 = vextract.low.u32 %v173
  %v175 = vextract.high.u32 %v173
  %v176 = vshrl.u32 %v175, 4
  %v177 = vmul.u32 %v176, 18
  %v178 = vsub.s32 %v172, %v177
  %v179 = vsub.s32 0, %v178
  %v180 = vsel %vm170, %v179, %v178
  %vm181 = vcmp.lt.s32.totalorder %v149, 0
  %v182 = vsub.s32 0, %v149
  %v183 = vsel %vm181, %v182, %v149
  %v184 = vmul.u32.u64.compose %v183, 3817748708
  %v185 = vextract.low.u32 %v184
  %v186 = vextract.high.u32 %v184
  %v187 = vshrl.u32 %v186, 4
  %v188 = vmul.u32 %v187, 18
  %v189 = vsub.s32 %v183, %v188
  %v190 = vsub.s32 0, %v189
  %v191 = vsel %vm181, %v190, %v189
  %vm192 = vcmp.lt.s32.totalorder %v150, 0
  %v193 = vsub.s32 0, %v150
  %v194 = vsel %vm192, %v193, %v150
  %v195 = vmul.u32.u64.compose %v194, 3817748708
  %v196 = vextract.low.u32 %v195
  %v197 = vextract.high.u32 %v195
  %v198 = vshrl.u32 %v197, 4
  %v199 = vmul.u32 %v198, 18
  %v200 = vsub.s32 %v194, %v199
  %v201 = vsub.s32 0, %v200
  %v202 = vsel %vm192, %v201, %v200
  %vm203 = vcmp.lt.s32.totalorder %v151, 0
  %v204 = vsub.s32 0, %v151
  %v205 = vsel %vm203, %v204, %v151
  %v206 = vmul.u32.u64.compose %v205, 3817748708
  %v207 = vextract.low.u32 %v206
  %v208 = vextract.high.u32 %v206
  %v209 = vshrl.u32 %v208, 4
  %v210 = vmul.u32 %v209, 18
  %v211 = vsub.s32 %v205, %v210
  %v212 = vsub.s32 0, %v211
  %v213 = vsel %vm203, %v212, %v211
  %vm214 = vcmp.lt.s32.totalorder %v152, 0
  %v215 = vsub.s32 0, %v152
  %v216 = vsel %vm214, %v215, %v152
  %v217 = vmul.u32.u64.compose %v216, 3817748708
  %v218 = vextract.low.u32 %v217
  %v219 = vextract.high.u32 %v217
  %v220 = vshrl.u32 %v219, 4
  %v221 = vmul.u32 %v220, 18
  %v222 = vsub.s32 %v216, %v221
  %v223 = vsub.s32 0, %v222
  %v224 = vsel %vm214, %v223, %v222
  %vm225 = vcmp.ne.s32.totalorder %v169, 0
  %vm226 = vcmp.ne.s32.totalorder %v180, 0
  %vm227 = vcmp.ne.s32.totalorder %v191, 0
  %vm228 = vcmp.ne.s32.totalorder %v202, 0
  %vm229 = vcmp.ne.s32.totalorder %v213, 0
  %vm230 = vcmp.ne.s32.totalorder %v224, 0
  %vm231 = vcmp.lt.s32.totalorder %v169, 0
  %vm232 = vcmp.lt.s32.totalorder %v180, 0
  %vm233 = vcmp.lt.s32.totalorder %v191, 0
  %vm234 = vcmp.lt.s32.totalorder %v202, 0
  %vm235 = vcmp.lt.s32.totalorder %v213, 0
  %vm236 = vcmp.lt.s32.totalorder %v224, 0
  %vm237 = vmand %vm231, %vm225
  %vm238 = vmand %vm232, %vm226
  %vm239 = vmand %vm233, %vm227
  %vm240 = vmand %vm234, %vm228
  %vm241 = vmand %vm235, %vm229
  %vm242 = vmand %vm236, %vm230
  %v243 = vadd.s32 %v169, 18
  %v244 = vadd.s32 %v180, 18
  %v245 = vadd.s32 %v191, 18
  %v246 = vadd.s32 %v202, 18
  %v247 = vadd.s32 %v213, 18
  %v248 = vadd.s32 %v224, 18
  %v249 = vsel %vm237, %v243, %v169
  %v250 = vsel %vm238, %v244, %v180
  %v251 = vsel %vm239, %v245, %v191
  %v252 = vsel %vm240, %v246, %v202
  %v253 = vsel %vm241, %v247, %v213
  %v254 = vsel %vm242, %v248, %v224
  %vm255 = vcmp.lt.s32.totalorder %v249, 16
  %vm256 = vcmp.lt.s32.totalorder %v250, 16
  %vm257 = vcmp.lt.s32.totalorder %v251, 16
  %vm258 = vcmp.lt.s32.totalorder %v252, 16
  %vm259 = vcmp.lt.s32.totalorder %v253, 16
  %vm260 = vcmp.lt.s32.totalorder %v254, 16
  %vm261 = vmand %vm153, %vm255
  %vm262 = vmand %vm154, %vm256
  %vm263 = vmand %vm155, %vm257
  %vm264 = vmand %vm156, %vm258
  %vm265 = vmand %vm157, %vm259
  %vm266 = vmand %vm158, %vm260
  %v267 = vsel %vm261, 1, 0
  %v268 = vsel %vm262, 1, 0
  %v269 = vsel %vm263, 1, 0
  %v270 = vsel %vm264, 1, 0
  %v271 = vsel %vm265, 1, 0
  %v272 = vsel %vm266, 1, 0
  %v273 = vcvt.s32.f32 %v267
  %v274 = vcvt.s32.f32 %v268
  %v275 = vcvt.s32.f32 %v269
  %v276 = vcvt.s32.f32 %v270
  %v277 = vcvt.s32.f32 %v271
  %v278 = vcvt.s32.f32 %v272
  %v279 = vld [vmem:[%s0] sm:$0xff]
  %v280 = vld [vmem:[%s0 + $0x8] sm:$0xff]
  %v281 = vld [vmem:[%s0 + $0x10] sm:$0xff]
  %v285 = vcombine.high %v279, %v279
  %v286 = vcombine.high %v280, %v280
  %v287 = vcombine.high %v281, %v281
  %291 = vst [vmem:[#allocation2] sm:$0xf] %v279
  %292 = vst [vmem:[#allocation2 + $0x8] sm:$0xf] %v285
  %293 = vst [vmem:[#allocation2 + $0x10] sm:$0xf] %v280
  %294 = vst [vmem:[#allocation2 + $0x18] sm:$0xf] %v286
  %295 = vst [vmem:[#allocation2 + $0x20] sm:$0xf] %v281
  %vm296 = vcmask 355328
  %297 = vst.msk [vmem:[#allocation2 + $0x28] sm:$0xf] %vm296, %v287
  %v298 = vcombine.low %v279, %v279
  %v299 = vcombine.low %v280, %v280
  %v300 = vcombine.low %v281, %v281
  %301 = vrot.lane.b32.xlu0 %v298, 127
  %v302 = vpop.permute.xlu0 %301
  %303 = vrot.lane.b32.xlu0 %v279, 127
  %v304 = vpop.permute.xlu0 %303
  %305 = vrot.lane.b32.xlu0 %v299, 127
  %v306 = vpop.permute.xlu0 %305
  %307 = vrot.lane.b32.xlu0 %v280, 127
  %v308 = vpop.permute.xlu0 %307
  %309 = vrot.lane.b32.xlu0 %v300, 127
  %v310 = vpop.permute.xlu0 %309
  %311 = vrot.lane.b32.xlu0 %v281, 127
  %v312 = vpop.permute.xlu0 %311
  %vm313 = vcmask 1039360
  %v314 = vsel %vm313, %v302, %v304
  %v315 = vsel %vm313, %v304, %v306
  %v316 = vsel %vm313, %v306, %v308
  %v317 = vsel %vm313, %v308, %v310
  %v318 = vsel %vm313, %v310, %v312
  %325 = vst [vmem:[#allocation2] sm:$0xf0] %v314
  %326 = vst [vmem:[#allocation2 + $0x8] sm:$0xf0] %v315
  %327 = vst [vmem:[#allocation2 + $0x10] sm:$0xf0] %v316
  %328 = vst [vmem:[#allocation2 + $0x18] sm:$0xf0] %v317
  %329 = vst [vmem:[#allocation2 + $0x20] sm:$0xf0] %v318
  %vm330 = vcmask 359428
  %331 = vst.msk [vmem:[#allocation2 + $0x28] sm:$0xf0] %vm330, %v312
  %332 = vrot.lane.b32.xlu0 %v279, 126
  %v333 = vpop.permute.xlu0 %332
  %334 = vrot.lane.b32.xlu0 %v285, 126
  %v335 = vpop.permute.xlu0 %334
  %336 = vrot.lane.b32.xlu0 %v280, 126
  %v337 = vpop.permute.xlu0 %336
  %338 = vrot.lane.b32.xlu0 %v286, 126
  %v339 = vpop.permute.xlu0 %338
  %340 = vrot.lane.b32.xlu0 %v281, 126
  %v341 = vpop.permute.xlu0 %340
  %342 = vrot.lane.b32.xlu0 %v287, 126
  %v343 = vpop.permute.xlu0 %342
  %vm344 = vcmask 1031168
  %v345 = vsel %vm344, %v333, %v335
  %v346 = vsel %vm344, %v335, %v337
  %v347 = vsel %vm344, %v337, %v339
  %v348 = vsel %vm344, %v339, %v341
  %v349 = vsel %vm344, %v341, %v343
  %356 = vst [vmem:[#allocation2 + $0x30] sm:$0xf] %v345
  %357 = vst [vmem:[#allocation2 + $0x38] sm:$0xf] %v346
  %358 = vst [vmem:[#allocation2 + $0x40] sm:$0xf] %v347
  %359 = vst [vmem:[#allocation2 + $0x48] sm:$0xf] %v348
  %360 = vst [vmem:[#allocation2 + $0x50] sm:$0xf] %v349
  %361 = vst.msk [vmem:[#allocation2 + $0x58] sm:$0xf] %vm296, %v343
  %362 = vrot.lane.b32.xlu0 %v298, 110
  %v363 = vpop.permute.xlu0 %362
  %364 = vrot.lane.b32.xlu0 %v279, 110
  %v365 = vpop.permute.xlu0 %364
  %366 = vrot.lane.b32.xlu0 %v299, 110
  %v367 = vpop.permute.xlu0 %366
  %368 = vrot.lane.b32.xlu0 %v280, 110
  %v369 = vpop.permute.xlu0 %368
  %370 = vrot.lane.b32.xlu0 %v300, 110
  %v371 = vpop.permute.xlu0 %370
  %372 = vrot.lane.b32.xlu0 %v281, 110
  %v373 = vpop.permute.xlu0 %372
  %vm374 = vcmask 900096
  %v375 = vsel %vm374, %v363, %v365
  %v376 = vsel %vm374, %v365, %v367
  %v377 = vsel %vm374, %v367, %v369
  %v378 = vsel %vm374, %v369, %v371
  %v379 = vsel %vm374, %v371, %v373
  %386 = vst [vmem:[#allocation2 + $0x30] sm:$0xf0] %v375
  %387 = vst [vmem:[#allocation2 + $0x38] sm:$0xf0] %v376
  %388 = vst [vmem:[#allocation2 + $0x40] sm:$0xf0] %v377
  %389 = vst [vmem:[#allocation2 + $0x48] sm:$0xf0] %v378
  %390 = vst [vmem:[#allocation2 + $0x50] sm:$0xf0] %v379
  %391 = vst.msk [vmem:[#allocation2 + $0x58] sm:$0xf0] %vm330, %v373
  %392 = vrot.lane.b32.xlu0 %v279, 109
  %v393 = vpop.permute.xlu0 %392
  %394 = vrot.lane.b32.xlu0 %v285, 109
  %v395 = vpop.permute.xlu0 %394
  %396 = vrot.lane.b32.xlu0 %v280, 109
  %v397 = vpop.permute.xlu0 %396
  %398 = vrot.lane.b32.xlu0 %v286, 109
  %v399 = vpop.permute.xlu0 %398
  %400 = vrot.lane.b32.xlu0 %v281, 109
  %v401 = vpop.permute.xlu0 %400
  %402 = vrot.lane.b32.xlu0 %v287, 109
  %v403 = vpop.permute.xlu0 %402
  %vm404 = vcmask 891904
  %v405 = vsel %vm404, %v393, %v395
  %v406 = vsel %vm404, %v395, %v397
  %v407 = vsel %vm404, %v397, %v399
  %v408 = vsel %vm404, %v399, %v401
  %v409 = vsel %vm404, %v401, %v403
  %416 = vst [vmem:[#allocation2 + $0x60] sm:$0xf] %v405
  %417 = vst [vmem:[#allocation2 + $0x68] sm:$0xf] %v406
  %418 = vst [vmem:[#allocation2 + $0x70] sm:$0xf] %v407
  %419 = vst [vmem:[#allocation2 + $0x78] sm:$0xf] %v408
  %420 = vst [vmem:[#allocation2 + $0x80] sm:$0xf] %v409
  %421 = vst.msk [vmem:[#allocation2 + $0x88] sm:$0xf] %vm296, %v403
  %422 = vrot.lane.b32.xlu0 %v298, 108
  %v423 = vpop.permute.xlu0 %422
  %424 = vrot.lane.b32.xlu0 %v279, 108
  %v425 = vpop.permute.xlu0 %424
  %426 = vrot.lane.b32.xlu0 %v299, 108
  %v427 = vpop.permute.xlu0 %426
  %428 = vrot.lane.b32.xlu0 %v280, 108
  %v429 = vpop.permute.xlu0 %428
  %430 = vrot.lane.b32.xlu0 %v300, 108
  %v431 = vpop.permute.xlu0 %430
  %432 = vrot.lane.b32.xlu0 %v281, 108
  %v433 = vpop.permute.xlu0 %432
  %vm434 = vcmask 883712
  %v435 = vsel %vm434, %v423, %v425
  %v436 = vsel %vm434, %v425, %v427
  %v437 = vsel %vm434, %v427, %v429
  %v438 = vsel %vm434, %v429, %v431
  %v439 = vsel %vm434, %v431, %v433
  %446 = vst [vmem:[#allocation2 + $0x60] sm:$0xf0] %v435
  %447 = vst [vmem:[#allocation2 + $0x68] sm:$0xf0] %v436
  %448 = vst [vmem:[#allocation2 + $0x70] sm:$0xf0] %v437
  %449 = vst [vmem:[#allocation2 + $0x78] sm:$0xf0] %v438
  %450 = vst [vmem:[#allocation2 + $0x80] sm:$0xf0] %v439
  %451 = vst.msk [vmem:[#allocation2 + $0x88] sm:$0xf0] %vm330, %v433
  %452 = vrot.lane.b32.xlu0 %v279, 92
  %v453 = vpop.permute.xlu0 %452
  %454 = vrot.lane.b32.xlu0 %v285, 92
  %v455 = vpop.permute.xlu0 %454
  %456 = vrot.lane.b32.xlu0 %v280, 92
  %v457 = vpop.permute.xlu0 %456
  %458 = vrot.lane.b32.xlu0 %v286, 92
  %v459 = vpop.permute.xlu0 %458
  %460 = vrot.lane.b32.xlu0 %v281, 92
  %v461 = vpop.permute.xlu0 %460
  %462 = vrot.lane.b32.xlu0 %v287, 92
  %v463 = vpop.permute.xlu0 %462
  %vm464 = vcmask 752640
  %v465 = vsel %vm464, %v453, %v455
  %v466 = vsel %vm464, %v455, %v457
  %v467 = vsel %vm464, %v457, %v459
  %v468 = vsel %vm464, %v459, %v461
  %v469 = vsel %vm464, %v461, %v463
  %476 = vst [vmem:[#allocation2 + $0x90] sm:$0xf] %v465
  %477 = vst [vmem:[#allocation2 + $0x98] sm:$0xf] %v466
  %478 = vst [vmem:[#allocation2 + $0xa0] sm:$0xf] %v467
  %479 = vst [vmem:[#allocation2 + $0xa8] sm:$0xf] %v468
  %480 = vst [vmem:[#allocation2 + $0xb0] sm:$0xf] %v469
  %481 = vst.msk [vmem:[#allocation2 + $0xb8] sm:$0xf] %vm296, %v463
  %482 = vrot.lane.b32.xlu0 %v298, 91
  %v483 = vpop.permute.xlu0 %482
  %484 = vrot.lane.b32.xlu0 %v279, 91
  %v485 = vpop.permute.xlu0 %484
  %486 = vrot.lane.b32.xlu0 %v299, 91
  %v487 = vpop.permute.xlu0 %486
  %488 = vrot.lane.b32.xlu0 %v280, 91
  %v489 = vpop.permute.xlu0 %488
  %490 = vrot.lane.b32.xlu0 %v300, 91
  %v491 = vpop.permute.xlu0 %490
  %492 = vrot.lane.b32.xlu0 %v281, 91
  %v493 = vpop.permute.xlu0 %492
  %vm494 = vcmask 744448
  %v495 = vsel %vm494, %v483, %v485
  %v496 = vsel %vm494, %v485, %v487
  %v497 = vsel %vm494, %v487, %v489
  %v498 = vsel %vm494, %v489, %v491
  %v499 = vsel %vm494, %v491, %v493
  %506 = vst [vmem:[#allocation2 + $0x90] sm:$0xf0] %v495
  %507 = vst [vmem:[#allocation2 + $0x98] sm:$0xf0] %v496
  %508 = vst [vmem:[#allocation2 + $0xa0] sm:$0xf0] %v497
  %509 = vst [vmem:[#allocation2 + $0xa8] sm:$0xf0] %v498
  %510 = vst [vmem:[#allocation2 + $0xb0] sm:$0xf0] %v499
  %511 = vst.msk [vmem:[#allocation2 + $0xb8] sm:$0xf0] %vm330, %v493
  %512 = vrot.lane.b32.xlu0 %v279, 90
  %v513 = vpop.permute.xlu0 %512
  %514 = vrot.lane.b32.xlu0 %v285, 90
  %v515 = vpop.permute.xlu0 %514
  %516 = vrot.lane.b32.xlu0 %v280, 90
  %v517 = vpop.permute.xlu0 %516
  %518 = vrot.lane.b32.xlu0 %v286, 90
  %v519 = vpop.permute.xlu0 %518
  %520 = vrot.lane.b32.xlu0 %v281, 90
  %v521 = vpop.permute.xlu0 %520
  %522 = vrot.lane.b32.xlu0 %v287, 90
  %v523 = vpop.permute.xlu0 %522
  %vm524 = vcmask 736256
  %v525 = vsel %vm524, %v513, %v515
  %v526 = vsel %vm524, %v515, %v517
  %v527 = vsel %vm524, %v517, %v519
  %v528 = vsel %vm524, %v519, %v521
  %v529 = vsel %vm524, %v521, %v523
  %536 = vst [vmem:[#allocation2 + $0xc0] sm:$0xf] %v525
  %537 = vst [vmem:[#allocation2 + $0xc8] sm:$0xf] %v526
  %538 = vst [vmem:[#allocation2 + $0xd0] sm:$0xf] %v527
  %539 = vst [vmem:[#allocation2 + $0xd8] sm:$0xf] %v528
  %540 = vst [vmem:[#allocation2 + $0xe0] sm:$0xf] %v529
  %541 = vst.msk [vmem:[#allocation2 + $0xe8] sm:$0xf] %vm296, %v523
  %v542 = vld [vmem:[%s3] sm:$0xff]
  %v543 = vld [vmem:[%s3 + $0x8] sm:$0xff]
  %v544 = vld [vmem:[%s3 + $0x10] sm:$0xff]
  %v545 = vld [vmem:[%s3 + $0x18] sm:$0xff]
  %v546 = vld [vmem:[#allocation2] sm:$0xff]
  %v547 = vld [vmem:[#allocation2 + $0x8] sm:$0xff]
  %v548 = vld [vmem:[#allocation2 + $0x10] sm:$0xff]
  %v549 = vld [vmem:[#allocation2 + $0x18] sm:$0xff]
  %v550 = vld [vmem:[#allocation2 + $0x20] sm:$0xff]
  %v551 = vld [vmem:[#allocation2 + $0x28] sm:$0xff]
  %v552 = vld [vmem:[#allocation2 + $0x30] sm:$0xff]
  %v553 = vld [vmem:[#allocation2 + $0x38] sm:$0xff]
  %v554 = vld [vmem:[#allocation2 + $0x40] sm:$0xff]
  %v555 = vld [vmem:[#allocation2 + $0x48] sm:$0xff]
  %v556 = vld [vmem:[#allocation2 + $0x50] sm:$0xff]
  %v557 = vld [vmem:[#allocation2 + $0x58] sm:$0xff]
  %v558 = vld [vmem:[#allocation2 + $0x60] sm:$0xff]
  %v559 = vld [vmem:[#allocation2 + $0x68] sm:$0xff]
  %v560 = vld [vmem:[#allocation2 + $0x70] sm:$0xff]
  %v561 = vld [vmem:[#allocation2 + $0x78] sm:$0xff]
  %v562 = vld [vmem:[#allocation2 + $0x80] sm:$0xff]
  %v563 = vld [vmem:[#allocation2 + $0x88] sm:$0xff]
  %v564 = vld [vmem:[#allocation2 + $0x90] sm:$0xff]
  %v565 = vld [vmem:[#allocation2 + $0x98] sm:$0xff]
  %v566 = vld [vmem:[#allocation2 + $0xa0] sm:$0xff]
  %v567 = vld [vmem:[#allocation2 + $0xa8] sm:$0xff]
  %v568 = vld [vmem:[#allocation2 + $0xb0] sm:$0xff]
  %v569 = vld [vmem:[#allocation2 + $0xb8] sm:$0xff]
  %v570 = vld [vmem:[#allocation2 + $0xc0] sm:$0xf]
  %v571 = vld [vmem:[#allocation2 + $0xc8] sm:$0xf]
  %v572 = vld [vmem:[#allocation2 + $0xd0] sm:$0xf]
  %v573 = vld [vmem:[#allocation2 + $0xd8] sm:$0xf]
  %v574 = vld [vmem:[#allocation2 + $0xe0] sm:$0xf]
  %v575 = vld [vmem:[#allocation2 + $0xe8] sm:$0xf]
  %v576 = vld [vmem:[%s4] sm:$0xff]
  %v577 = vld [vmem:[%s4 + $0x8] sm:$0xff]
  %v578 = vld [vmem:[%s4 + $0x10] sm:$0xff]
  %v579 = vld [vmem:[%s4 + $0x18] sm:$0xff]
  %581 = vset.pattern.permute.xlu0 0
  %582 = vperm.xlu0 %581, %v576
  %v583 = vpop.permute.xlu0 %582
  %586 = vset.pattern.permute.xlu0 0
  %587 = vperm.xlu0 %586, %v577
  %v588 = vpop.permute.xlu0 %587
  %591 = vset.pattern.permute.xlu0 0
  %592 = vperm.xlu0 %591, %v578
  %v593 = vpop.permute.xlu0 %592
  %596 = vset.pattern.permute.xlu0 0
  %597 = vperm.xlu0 %596, %v579
  %v598 = vpop.permute.xlu0 %597
  %vm600 = vcmask 293888
  %v602 = vsel %vm600, %v542, 0
  %v605 = vsel %vm600, %v543, 0
  %v608 = vsel %vm600, %v544, 0
  %v611 = vsel %vm600, %v545, 0
  %vm613 = vcmask 1043456
  %v615 = vsel %vm613, %v570, 0
  %v618 = vsel %vm613, %v571, 0
  %v621 = vsel %vm613, %v572, 0
  %v624 = vsel %vm613, %v573, 0
  %v627 = vsel %vm613, %v574, 0
  %v630 = vsel %vm613, %v575, 0
  %632 = vmatprep.subr.mxu0 %v547
  %633 = vmatpush1.msra.mxu0 %v546
  %634 = vmatprep.subr.mxu0 %v553
  %635 = vmatpush1.msra.mxu0 %v552
  %636 = vmatprep.subr.mxu0 %v559
  %637 = vmatpush1.msra.mxu0 %v558
  %638 = vmatprep.subr.mxu0 %v565
  %639 = vmatpush1.msra.mxu0 %v564
  %640 = vmatprep.subr.mxu0 %v618
  %641 = vmatpush1.msra.mxu0 %v615
  %642 = vmatprep.subr.mxu0 0.0
  %643 = vmatpush1.msra.mxu0 0.0
  %644 = vmatprep.subr.mxu0 0.0
  %645 = vmatpush1.msra.mxu0 0.0
  %646 = vmatprep.subr.mxu0 0.0
  %647 = vmatpush1.msra.mxu0 0.0
  %648 = vmatprep.subr.mxu0 0.0
  %649 = vmatpush1.msra.mxu0 0.0
  %650 = vmatprep.subr.mxu0 0.0
  %651 = vmatpush1.msra.mxu0 0.0
  %652 = vmatprep.subr.mxu0 0.0
  %653 = vmatpush1.msra.mxu0 0.0
  %654 = vmatprep.subr.mxu0 0.0
  %655 = vmatpush1.msra.mxu0 0.0
  %656 = vmatprep.subr.mxu0 0.0
  %657 = vmatpush1.msra.mxu0 0.0
  %658 = vmatprep.subr.mxu0 0.0
  %659 = vmatpush1.msra.mxu0 0.0
  %660 = vmatprep.subr.mxu0 0.0
  %661 = vmatpush1.msra.mxu0 0.0
  %662 = vmatprep.subr.mxu0 0.0
  %663 = vmatpush1.msra.mxu0 0.0
  %664 = vmatprep.subr.mxu0 0.0
  %665 = vmatpush1.msra.mxu0 0.0
  %666 = vmatprep.subr.mxu0 0.0
  %667 = vmatpush1.msra.mxu0 0.0
  %668 = vmatprep.subr.mxu0 0.0
  %669 = vmatpush1.msra.mxu0 0.0
  %670 = vmatprep.subr.mxu0 0.0
  %671 = vmatpush1.msra.mxu0 0.0
  %672 = vmatprep.subr.mxu0 0.0
  %673 = vmatpush1.msra.mxu0 0.0
  %674 = vmatprep.subr.mxu0 0.0
  %675 = vmatpush1.msra.mxu0 0.0
  %676 = vmatprep.subr.mxu0 0.0
  %677 = vmatpush1.msra.mxu0 0.0
  %678 = vmatprep.subr.mxu0 0.0
  %679 = vmatpush1.msra.mxu0 0.0
  %680 = vmatprep.subr.mxu0 0.0
  %681 = vmatpush1.msra.mxu0 0.0
  %682 = vmatprep.subr.mxu0 0.0
  %683 = vmatpush1.msra.mxu0 0.0
  %684 = vmatprep.subr.mxu0 0.0
  %685 = vmatpush1.msra.mxu0 0.0
  %686 = vmatprep.subr.mxu0 0.0
  %687 = vmatpush1.msra.mxu0 0.0
  %688 = vmatprep.subr.mxu0 0.0
  %689 = vmatpush1.msra.mxu0 0.0
  %690 = vmatprep.subr.mxu0 0.0
  %691 = vmatpush1.msra.mxu0 0.0
  %692 = vmatprep.subr.mxu0 0.0
  %693 = vmatpush1.msra.mxu0 0.0
  %694 = vmatprep.subr.mxu0 0.0
  %695 = vmatpush1.msra.mxu0 0.0
  %696 = vmatprep.mubr.f32.mxu0 0.0
  %697 = vmatmul.mubr.f32.gmra.mrb[0].mxu0 %v602
  %v698 = vpop.f32.mrb[0].mxu0
  %v699 = vadd.f32 %v583, %v698
  %v700 = vpop.f32.mrb[0].mxu0
  %v701 = vadd.f32 %v583, %v700
  %702 = vmatprep.mubr.f32.mxu0 0.0
  %703 = vmatmul.mubr.f32.gmra.mrb[0].mxu0 %v605
  %v704 = vpop.f32.mrb[0].mxu0
  %v705 = vadd.f32 %v588, %v704
  %v706 = vpop.f32.mrb[0].mxu0
  %v707 = vadd.f32 %v588, %v706
  %708 = vmatprep.mubr.f32.mxu0 0.0
  %709 = vmatmul.mubr.f32.gmra.mrb[0].mxu0 %v608
  %v710 = vpop.f32.mrb[0].mxu0
  %v711 = vadd.f32 %v593, %v710
  %v712 = vpop.f32.mrb[0].mxu0
  %v713 = vadd.f32 %v593, %v712
  %714 = vmatprep.mubr.f32.mxu0 0.0
  %715 = vmatmul.mubr.f32.gmra.mrb[0].mxu0 %v611
  %v716 = vpop.f32.mrb[0].mxu0
  %v717 = vadd.f32 %v598, %v716
  %v718 = vpop.f32.mrb[0].mxu0
  %v719 = vadd.f32 %v598, %v718
  %720 = vdwg.mxu0
  %721 = vmatprep.subr.mxu0 %v549
  %722 = vmatpush1.msra.mxu0 %v548
  %723 = vmatprep.subr.mxu0 %v555
  %724 = vmatpush1.msra.mxu0 %v554
  %725 = vmatprep.subr.mxu0 %v561
  %726 = vmatpush1.msra.mxu0 %v560
  %727 = vmatprep.subr.mxu0 %v567
  %728 = vmatpush1.msra.mxu0 %v566
  %729 = vmatprep.subr.mxu0 %v624
  %730 = vmatpush1.msra.mxu0 %v621
  %731 = vmatprep.subr.mxu0 0.0
  %732 = vmatpush1.msra.mxu0 0.0
  %733 = vmatprep.subr.mxu0 0.0
  %734 = vmatpush1.msra.mxu0 0.0
  %735 = vmatprep.subr.mxu0 0.0
  %736 = vmatpush1.msra.mxu0 0.0
  %737 = vmatprep.subr.mxu0 0.0
  %738 = vmatpush1.msra.mxu0 0.0
  %739 = vmatprep.subr.mxu0 0.0
  %740 = vmatpush1.msra.mxu0 0.0
  %741 = vmatprep.subr.mxu0 0.0
  %742 = vmatpush1.msra.mxu0 0.0
  %743 = vmatprep.subr.mxu0 0.0
  %744 = vmatpush1.msra.mxu0 0.0
  %745 = vmatprep.subr.mxu0 0.0
  %746 = vmatpush1.msra.mxu0 0.0
  %747 = vmatprep.subr.mxu0 0.0
  %748 = vmatpush1.msra.mxu0 0.0
  %749 = vmatprep.subr.mxu0 0.0
  %750 = vmatpush1.msra.mxu0 0.0
  %751 = vmatprep.subr.mxu0 0.0
  %752 = vmatpush1.msra.mxu0 0.0
  %753 = vmatprep.subr.mxu0 0.0
  %754 = vmatpush1.msra.mxu0 0.0
  %755 = vmatprep.subr.mxu0 0.0
  %756 = vmatpush1.msra.mxu0 0.0
  %757 = vmatprep.subr.mxu0 0.0
  %758 = vmatpush1.msra.mxu0 0.0
  %759 = vmatprep.subr.mxu0 0.0
  %760 = vmatpush1.msra.mxu0 0.0
  %761 = vmatprep.subr.mxu0 0.0
  %762 = vmatpush1.msra.mxu0 0.0
  %763 = vmatprep.subr.mxu0 0.0
  %764 = vmatpush1.msra.mxu0 0.0
  %765 = vmatprep.subr.mxu0 0.0
  %766 = vmatpush1.msra.mxu0 0.0
  %767 = vmatprep.subr.mxu0 0.0
  %768 = vmatpush1.msra.mxu0 0.0
  %769 = vmatprep.subr.mxu0 0.0
  %770 = vmatpush1.msra.mxu0 0.0
  %771 = vmatprep.subr.mxu0 0.0
  %772 = vmatpush1.msra.mxu0 0.0
  %773 = vmatprep.subr.mxu0 0.0
  %774 = vmatpush1.msra.mxu0 0.0
  %775 = vmatprep.subr.mxu0 0.0
  %776 = vmatpush1.msra.mxu0 0.0
  %777 = vmatprep.subr.mxu0 0.0
  %778 = vmatpush1.msra.mxu0 0.0
  %779 = vmatprep.subr.mxu0 0.0
  %780 = vmatpush1.msra.mxu0 0.0
  %781 = vmatprep.subr.mxu0 0.0
  %782 = vmatpush1.msra.mxu0 0.0
  %783 = vmatprep.subr.mxu0 0.0
  %784 = vmatpush1.msra.mxu0 0.0
  %785 = vmatprep.mubr.f32.mxu0 0.0
  %786 = vmatmul.mubr.f32.gmra.mrb[0].mxu0 %v602
  %v787 = vpop.f32.mrb[0].mxu0
  %v788 = vadd.f32 %v583, %v787
  %v789 = vpop.f32.mrb[0].mxu0
  %v790 = vadd.f32 %v583, %v789
  %791 = vmatprep.mubr.f32.mxu0 0.0
  %792 = vmatmul.mubr.f32.gmra.mrb[0].mxu0 %v605
  %v793 = vpop.f32.mrb[0].mxu0
  %v794 = vadd.f32 %v588, %v793
  %v795 = vpop.f32.mrb[0].mxu0
  %v796 = vadd.f32 %v588, %v795
  %797 = vmatprep.mubr.f32.mxu0 0.0
  %798 = vmatmul.mubr.f32.gmra.mrb[0].mxu0 %v608
  %v799 = vpop.f32.mrb[0].mxu0
  %v800 = vadd.f32 %v593, %v799
  %v801 = vpop.f32.mrb[0].mxu0
  %v802 = vadd.f32 %v593, %v801
  %803 = vmatprep.mubr.f32.mxu0 0.0
  %804 = vmatmul.mubr.f32.gmra.mrb[0].mxu0 %v611
  %v805 = vpop.f32.mrb[0].mxu0
  %v806 = vadd.f32 %v598, %v805
  %v807 = vpop.f32.mrb[0].mxu0
  %v808 = vadd.f32 %v598, %v807
  %809 = vdwg.mxu0
  %810 = vmatprep.subr.mxu0 %v551
  %811 = vmatpush1.msra.mxu0 %v550
  %812 = vmatprep.subr.mxu0 %v557
  %813 = vmatpush1.msra.mxu0 %v556
  %814 = vmatprep.subr.mxu0 %v563
  %815 = vmatpush1.msra.mxu0 %v562
  %816 = vmatprep.subr.mxu0 %v569
  %817 = vmatpush1.msra.mxu0 %v568
  %818 = vmatprep.subr.mxu0 %v630
  %819 = vmatpush1.msra.mxu0 %v627
  %820 = vmatprep.subr.mxu0 0.0
  %821 = vmatpush1.msra.mxu0 0.0
  %822 = vmatprep.subr.mxu0 0.0
  %823 = vmatpush1.msra.mxu0 0.0
  %824 = vmatprep.subr.mxu0 0.0
  %825 = vmatpush1.msra.mxu0 0.0
  %826 = vmatprep.subr.mxu0 0.0
  %827 = vmatpush1.msra.mxu0 0.0
  %828 = vmatprep.subr.mxu0 0.0
  %829 = vmatpush1.msra.mxu0 0.0
  %830 = vmatprep.subr.mxu0 0.0
  %831 = vmatpush1.msra.mxu0 0.0
  %832 = vmatprep.subr.mxu0 0.0
  %833 = vmatpush1.msra.mxu0 0.0
  %834 = vmatprep.subr.mxu0 0.0
  %835 = vmatpush1.msra.mxu0 0.0
  %836 = vmatprep.subr.mxu0 0.0
  %837 = vmatpush1.msra.mxu0 0.0
  %838 = vmatprep.subr.mxu0 0.0
  %839 = vmatpush1.msra.mxu0 0.0
  %840 = vmatprep.subr.mxu0 0.0
  %841 = vmatpush1.msra.mxu0 0.0
  %842 = vmatprep.subr.mxu0 0.0
  %843 = vmatpush1.msra.mxu0 0.0
  %844 = vmatprep.subr.mxu0 0.0
  %845 = vmatpush1.msra.mxu0 0.0
  %846 = vmatprep.subr.mxu0 0.0
  %847 = vmatpush1.msra.mxu0 0.0
  %848 = vmatprep.subr.mxu0 0.0
  %849 = vmatpush1.msra.mxu0 0.0
  %850 = vmatprep.subr.mxu0 0.0
  %851 = vmatpush1.msra.mxu0 0.0
  %852 = vmatprep.subr.mxu0 0.0
  %853 = vmatpush1.msra.mxu0 0.0
  %854 = vmatprep.subr.mxu0 0.0
  %855 = vmatpush1.msra.mxu0 0.0
  %856 = vmatprep.subr.mxu0 0.0
  %857 = vmatpush1.msra.mxu0 0.0
  %858 = vmatprep.subr.mxu0 0.0
  %859 = vmatpush1.msra.mxu0 0.0
  %860 = vmatprep.subr.mxu0 0.0
  %861 = vmatpush1.msra.mxu0 0.0
  %862 = vmatprep.subr.mxu0 0.0
  %863 = vmatpush1.msra.mxu0 0.0
  %864 = vmatprep.subr.mxu0 0.0
  %865 = vmatpush1.msra.mxu0 0.0
  %866 = vmatprep.subr.mxu0 0.0
  %867 = vmatpush1.msra.mxu0 0.0
  %868 = vmatprep.subr.mxu0 0.0
  %869 = vmatpush1.msra.mxu0 0.0
  %870 = vmatprep.subr.mxu0 0.0
  %871 = vmatpush1.msra.mxu0 0.0
  %872 = vmatprep.subr.mxu0 0.0
  %873 = vmatpush1.msra.mxu0 0.0
  %874 = vmatprep.mubr.f32.mxu0 0.0
  %875 = vmatmul.mubr.f32.gmra.mrb[0].mxu0 %v602
  %v876 = vpop.f32.mrb[0].mxu0
  %v877 = vadd.f32 %v583, %v876
  %v878 = vpop.f32.mrb[0].mxu0
  %v879 = vadd.f32 %v583, %v878
  %880 = vmatprep.mubr.f32.mxu0 0.0
  %881 = vmatmul.mubr.f32.gmra.mrb[0].mxu0 %v605
  %v882 = vpop.f32.mrb[0].mxu0
  %v883 = vadd.f32 %v588, %v882
  %v884 = vpop.f32.mrb[0].mxu0
  %v885 = vadd.f32 %v588, %v884
  %886 = vmatprep.mubr.f32.mxu0 0.0
  %887 = vmatmul.mubr.f32.gmra.mrb[0].mxu0 %v608
  %v888 = vpop.f32.mrb[0].mxu0
  %v889 = vadd.f32 %v593, %v888
  %v890 = vpop.f32.mrb[0].mxu0
  %v891 = vadd.f32 %v593, %v890
  %892 = vmatprep.mubr.f32.mxu0 0.0
  %893 = vmatmul.mubr.f32.gmra.mrb[0].mxu0 %v611
  %v894 = vpop.f32.mrb[0].mxu0
  %v895 = vadd.f32 %v598, %v894
  %v896 = vpop.f32.mrb[0].mxu0
  %v897 = vadd.f32 %v598, %v896
  %898 = vdwg.mxu0
  %899 = vst [vmem:[#allocation3] sm:$0xff] %v699
  %900 = vst [vmem:[#allocation3 + $0x8] sm:$0xff] %v701
  %901 = vst [vmem:[#allocation3 + $0x10] sm:$0xff] %v788
  %902 = vst [vmem:[#allocation3 + $0x18] sm:$0xff] %v790
  %903 = vst [vmem:[#allocation3 + $0x20] sm:$0xff] %v877
  %vm904 = vcmask 359424
  %905 = vst.msk [vmem:[#allocation3 + $0x28] sm:$0xff] %vm904, %v879
  %906 = vst [vmem:[#allocation3 + $0x30] sm:$0xff] %v705
  %907 = vst [vmem:[#allocation3 + $0x38] sm:$0xff] %v707
  %908 = vst [vmem:[#allocation3 + $0x40] sm:$0xff] %v794
  %909 = vst [vmem:[#allocation3 + $0x48] sm:$0xff] %v796
  %910 = vst [vmem:[#allocation3 + $0x50] sm:$0xff] %v883
  %911 = vst.msk [vmem:[#allocation3 + $0x58] sm:$0xff] %vm904, %v885
  %912 = vst [vmem:[#allocation3 + $0x60] sm:$0xff] %v711
  %913 = vst [vmem:[#allocation3 + $0x68] sm:$0xff] %v713
  %914 = vst [vmem:[#allocation3 + $0x70] sm:$0xff] %v800
  %915 = vst [vmem:[#allocation3 + $0x78] sm:$0xff] %v802
  %916 = vst [vmem:[#allocation3 + $0x80] sm:$0xff] %v889
  %917 = vst.msk [vmem:[#allocation3 + $0x88] sm:$0xff] %vm904, %v891
  %918 = vst [vmem:[#allocation3 + $0x90] sm:$0xff] %v717
  %919 = vst [vmem:[#allocation3 + $0x98] sm:$0xff] %v719
  %920 = vst [vmem:[#allocation3 + $0xa0] sm:$0xff] %v806
  %921 = vst [vmem:[#allocation3 + $0xa8] sm:$0xff] %v808
  %922 = vst [vmem:[#allocation3 + $0xb0] sm:$0xff] %v895
  %923 = vst.msk [vmem:[#allocation3 + $0xb8] sm:$0xff] %vm904, %v897
  %v924 = vld [vmem:[%s1] sm:$0xf]
  %v925 = vld [vmem:[#allocation2] sm:$0xff]
  %v926 = vld [vmem:[#allocation2 + $0x8] sm:$0xff]
  %v927 = vld [vmem:[#allocation2 + $0x10] sm:$0xff]
  %v928 = vld [vmem:[#allocation2 + $0x18] sm:$0xff]
  %v929 = vld [vmem:[#allocation2 + $0x20] sm:$0xff]
  %v930 = vld [vmem:[#allocation2 + $0x28] sm:$0xff]
  %v931 = vld [vmem:[#allocation2 + $0x30] sm:$0xff]
  %v932 = vld [vmem:[#allocation2 + $0x38] sm:$0xff]
  %v933 = vld [vmem:[#allocation2 + $0x40] sm:$0xff]
  %v934 = vld [vmem:[#allocation2 + $0x48] sm:$0xff]
  %v935 = vld [vmem:[#allocation2 + $0x50] sm:$0xff]
  %v936 = vld [vmem:[#allocation2 + $0x58] sm:$0xff]
  %v937 = vld [vmem:[#allocation2 + $0x60] sm:$0xff]
  %v938 = vld [vmem:[#allocation2 + $0x68] sm:$0xff]
  %v939 = vld [vmem:[#allocation2 + $0x70] sm:$0xff]
  %v940 = vld [vmem:[#allocation2 + $0x78] sm:$0xff]
  %v941 = vld [vmem:[#allocation2 + $0x80] sm:$0xff]
  %v942 = vld [vmem:[#allocation2 + $0x88] sm:$0xff]
  %v943 = vld [vmem:[#allocation2 + $0x90] sm:$0xff]
  %v944 = vld [vmem:[#allocation2 + $0x98] sm:$0xff]
  %v945 = vld [vmem:[#allocation2 + $0xa0] sm:$0xff]
  %v946 = vld [vmem:[#allocation2 + $0xa8] sm:$0xff]
  %v947 = vld [vmem:[#allocation2 + $0xb0] sm:$0xff]
  %v948 = vld [vmem:[#allocation2 + $0xb8] sm:$0xff]
  %v949 = vld [vmem:[#allocation2 + $0xc0] sm:$0xf]
  %v950 = vld [vmem:[#allocation2 + $0xc8] sm:$0xf]
  %v951 = vld [vmem:[#allocation2 + $0xd0] sm:$0xf]
  %v952 = vld [vmem:[#allocation2 + $0xd8] sm:$0xf]
  %v953 = vld [vmem:[#allocation2 + $0xe0] sm:$0xf]
  %v954 = vld [vmem:[#allocation2 + $0xe8] sm:$0xf]
  %v956 = vsel %vm600, %v924, 0
  %v959 = vsel %vm613, %v949, 0
  %v962 = vsel %vm613, %v950, 0
  %v965 = vsel %vm613, %v951, 0
  %v968 = vsel %vm613, %v952, 0
  %v971 = vsel %vm613, %v953, 0
  %v974 = vsel %vm613, %v954, 0
  %976 = vmatprep.subr.mxu0 %v926
  %977 = vmatpush1.msra.mxu0 %v925
  %978 = vmatprep.subr.mxu0 %v932
  %979 = vmatpush1.msra.mxu0 %v931
  %980 = vmatprep.subr.mxu0 %v938
  %981 = vmatpush1.msra.mxu0 %v937
  %982 = vmatprep.subr.mxu0 %v944
  %983 = vmatpush1.msra.mxu0 %v943
  %984 = vmatprep.subr.mxu0 %v962
  %985 = vmatpush1.msra.mxu0 %v959
  %986 = vmatprep.subr.mxu0 0.0
  %987 = vmatpush1.msra.mxu0 0.0
  %988 = vmatprep.subr.mxu0 0.0
  %989 = vmatpush1.msra.mxu0 0.0
  %990 = vmatprep.subr.mxu0 0.0
  %991 = vmatpush1.msra.mxu0 0.0
  %992 = vmatprep.subr.mxu0 0.0
  %993 = vmatpush1.msra.mxu0 0.0
  %994 = vmatprep.subr.mxu0 0.0
  %995 = vmatpush1.msra.mxu0 0.0
  %996 = vmatprep.subr.mxu0 0.0
  %997 = vmatpush1.msra.mxu0 0.0
  %998 = vmatprep.subr.mxu0 0.0
  %999 = vmatpush1.msra.mxu0 0.0
  %1000 = vmatprep.subr.mxu0 0.0
  %1001 = vmatpush1.msra.mxu0 0.0
  %1002 = vmatprep.subr.mxu0 0.0
  %1003 = vmatpush1.msra.mxu0 0.0
  %1004 = vmatprep.subr.mxu0 0.0
  %1005 = vmatpush1.msra.mxu0 0.0
  %1006 = vmatprep.subr.mxu0 0.0
  %1007 = vmatpush1.msra.mxu0 0.0
  %1008 = vmatprep.subr.mxu0 0.0
  %1009 = vmatpush1.msra.mxu0 0.0
  %1010 = vmatprep.subr.mxu0 0.0
  %1011 = vmatpush1.msra.mxu0 0.0
  %1012 = vmatprep.subr.mxu0 0.0
  %1013 = vmatpush1.msra.mxu0 0.0
  %1014 = vmatprep.subr.mxu0 0.0
  %1015 = vmatpush1.msra.mxu0 0.0
  %1016 = vmatprep.subr.mxu0 0.0
  %1017 = vmatpush1.msra.mxu0 0.0
  %1018 = vmatprep.subr.mxu0 0.0
  %1019 = vmatpush1.msra.mxu0 0.0
  %1020 = vmatprep.subr.mxu0 0.0
  %1021 = vmatpush1.msra.mxu0 0.0
  %1022 = vmatprep.subr.mxu0 0.0
  %1023 = vmatpush1.msra.mxu0 0.0
  %1024 = vmatprep.subr.mxu0 0.0
  %1025 = vmatpush1.msra.mxu0 0.0
  %1026 = vmatprep.subr.mxu0 0.0
  %1027 = vmatpush1.msra.mxu0 0.0
  %1028 = vmatprep.subr.mxu0 0.0
  %1029 = vmatpush1.msra.mxu0 0.0
  %1030 = vmatprep.subr.mxu0 0.0
  %1031 = vmatpush1.msra.mxu0 0.0
  %1032 = vmatprep.subr.mxu0 0.0
  %1033 = vmatpush1.msra.mxu0 0.0
  %1034 = vmatprep.subr.mxu0 0.0
  %1035 = vmatpush1.msra.mxu0 0.0
  %1036 = vmatprep.subr.mxu0 0.0
  %1037 = vmatpush1.msra.mxu0 0.0
  %1038 = vmatprep.subr.mxu0 0.0
  %1039 = vmatpush1.msra.mxu0 0.0
  %1040 = vmatprep.mubr.f32.mxu0 0.0
  %1041 = vmatmul.mubr.f32.gmra.mrb[0].mxu0 %v956
  %v1042 = vpop.f32.mrb[0].mxu0
  %v1043 = vadd.f32 0.0, %v1042
  %v1044 = vpop.f32.mrb[0].mxu0
  %v1045 = vadd.f32 0.0, %v1044
  %1046 = vdwg.mxu0
  %1047 = vmatprep.subr.mxu0 %v928
  %1048 = vmatpush1.msra.mxu0 %v927
  %1049 = vmatprep.subr.mxu0 %v934
  %1050 = vmatpush1.msra.mxu0 %v933
  %1051 = vmatprep.subr.mxu0 %v940
  %1052 = vmatpush1.msra.mxu0 %v939
  %1053 = vmatprep.subr.mxu0 %v946
  %1054 = vmatpush1.msra.mxu0 %v945
  %1055 = vmatprep.subr.mxu0 %v968
  %1056 = vmatpush1.msra.mxu0 %v965
  %1057 = vmatprep.subr.mxu0 0.0
  %1058 = vmatpush1.msra.mxu0 0.0
  %1059 = vmatprep.subr.mxu0 0.0
  %1060 = vmatpush1.msra.mxu0 0.0
  %1061 = vmatprep.subr.mxu0 0.0
  %1062 = vmatpush1.msra.mxu0 0.0
  %1063 = vmatprep.subr.mxu0 0.0
  %1064 = vmatpush1.msra.mxu0 0.0
  %1065 = vmatprep.subr.mxu0 0.0
  %1066 = vmatpush1.msra.mxu0 0.0
  %1067 = vmatprep.subr.mxu0 0.0
  %1068 = vmatpush1.msra.mxu0 0.0
  %1069 = vmatprep.subr.mxu0 0.0
  %1070 = vmatpush1.msra.mxu0 0.0
  %1071 = vmatprep.subr.mxu0 0.0
  %1072 = vmatpush1.msra.mxu0 0.0
  %1073 = vmatprep.subr.mxu0 0.0
  %1074 = vmatpush1.msra.mxu0 0.0
  %1075 = vmatprep.subr.mxu0 0.0
  %1076 = vmatpush1.msra.mxu0 0.0
  %1077 = vmatprep.subr.mxu0 0.0
  %1078 = vmatpush1.msra.mxu0 0.0
  %1079 = vmatprep.subr.mxu0 0.0
  %1080 = vmatpush1.msra.mxu0 0.0
  %1081 = vmatprep.subr.mxu0 0.0
  %1082 = vmatpush1.msra.mxu0 0.0
  %1083 = vmatprep.subr.mxu0 0.0
  %1084 = vmatpush1.msra.mxu0 0.0
  %1085 = vmatprep.subr.mxu0 0.0
  %1086 = vmatpush1.msra.mxu0 0.0
  %1087 = vmatprep.subr.mxu0 0.0
  %1088 = vmatpush1.msra.mxu0 0.0
  %1089 = vmatprep.subr.mxu0 0.0
  %1090 = vmatpush1.msra.mxu0 0.0
  %1091 = vmatprep.subr.mxu0 0.0
  %1092 = vmatpush1.msra.mxu0 0.0
  %1093 = vmatprep.subr.mxu0 0.0
  %1094 = vmatpush1.msra.mxu0 0.0
  %1095 = vmatprep.subr.mxu0 0.0
  %1096 = vmatpush1.msra.mxu0 0.0
  %1097 = vmatprep.subr.mxu0 0.0
  %1098 = vmatpush1.msra.mxu0 0.0
  %1099 = vmatprep.subr.mxu0 0.0
  %1100 = vmatpush1.msra.mxu0 0.0
  %1101 = vmatprep.subr.mxu0 0.0
  %1102 = vmatpush1.msra.mxu0 0.0
  %1103 = vmatprep.subr.mxu0 0.0
  %1104 = vmatpush1.msra.mxu0 0.0
  %1105 = vmatprep.subr.mxu0 0.0
  %1106 = vmatpush1.msra.mxu0 0.0
  %1107 = vmatprep.subr.mxu0 0.0
  %1108 = vmatpush1.msra.mxu0 0.0
  %1109 = vmatprep.subr.mxu0 0.0
  %1110 = vmatpush1.msra.mxu0 0.0
  %1111 = vmatprep.mubr.f32.mxu0 0.0
  %1112 = vmatmul.mubr.f32.gmra.mrb[0].mxu0 %v956
  %v1113 = vpop.f32.mrb[0].mxu0
  %v1114 = vadd.f32 0.0, %v1113
  %v1115 = vpop.f32.mrb[0].mxu0
  %v1116 = vadd.f32 0.0, %v1115
  %1117 = vdwg.mxu0
  %1118 = vmatprep.subr.mxu0 %v930
  %1119 = vmatpush1.msra.mxu0 %v929
  %1120 = vmatprep.subr.mxu0 %v936
  %1121 = vmatpush1.msra.mxu0 %v935
  %1122 = vmatprep.subr.mxu0 %v942
  %1123 = vmatpush1.msra.mxu0 %v941
  %1124 = vmatprep.subr.mxu0 %v948
  %1125 = vmatpush1.msra.mxu0 %v947
  %1126 = vmatprep.subr.mxu0 %v974
  %1127 = vmatpush1.msra.mxu0 %v971
  %1128 = vmatprep.subr.mxu0 0.0
  %1129 = vmatpush1.msra.mxu0 0.0
  %1130 = vmatprep.subr.mxu0 0.0
  %1131 = vmatpush1.msra.mxu0 0.0
  %1132 = vmatprep.subr.mxu0 0.0
  %1133 = vmatpush1.msra.mxu0 0.0
  %1134 = vmatprep.subr.mxu0 0.0
  %1135 = vmatpush1.msra.mxu0 0.0
  %1136 = vmatprep.subr.mxu0 0.0
  %1137 = vmatpush1.msra.mxu0 0.0
  %1138 = vmatprep.subr.mxu0 0.0
  %1139 = vmatpush1.msra.mxu0 0.0
  %1140 = vmatprep.subr.mxu0 0.0
  %1141 = vmatpush1.msra.mxu0 0.0
  %1142 = vmatprep.subr.mxu0 0.0
  %1143 = vmatpush1.msra.mxu0 0.0
  %1144 = vmatprep.subr.mxu0 0.0
  %1145 = vmatpush1.msra.mxu0 0.0
  %1146 = vmatprep.subr.mxu0 0.0
  %1147 = vmatpush1.msra.mxu0 0.0
  %1148 = vmatprep.subr.mxu0 0.0
  %1149 = vmatpush1.msra.mxu0 0.0
  %1150 = vmatprep.subr.mxu0 0.0
  %1151 = vmatpush1.msra.mxu0 0.0
  %1152 = vmatprep.subr.mxu0 0.0
  %1153 = vmatpush1.msra.mxu0 0.0
  %1154 = vmatprep.subr.mxu0 0.0
  %1155 = vmatpush1.msra.mxu0 0.0
  %1156 = vmatprep.subr.mxu0 0.0
  %1157 = vmatpush1.msra.mxu0 0.0
  %1158 = vmatprep.subr.mxu0 0.0
  %1159 = vmatpush1.msra.mxu0 0.0
  %1160 = vmatprep.subr.mxu0 0.0
  %1161 = vmatpush1.msra.mxu0 0.0
  %1162 = vmatprep.subr.mxu0 0.0
  %1163 = vmatpush1.msra.mxu0 0.0
  %1164 = vmatprep.subr.mxu0 0.0
  %1165 = vmatpush1.msra.mxu0 0.0
  %1166 = vmatprep.subr.mxu0 0.0
  %1167 = vmatpush1.msra.mxu0 0.0
  %1168 = vmatprep.subr.mxu0 0.0
  %1169 = vmatpush1.msra.mxu0 0.0
  %1170 = vmatprep.subr.mxu0 0.0
  %1171 = vmatpush1.msra.mxu0 0.0
  %1172 = vmatprep.subr.mxu0 0.0
  %1173 = vmatpush1.msra.mxu0 0.0
  %1174 = vmatprep.subr.mxu0 0.0
  %1175 = vmatpush1.msra.mxu0 0.0
  %1176 = vmatprep.subr.mxu0 0.0
  %1177 = vmatpush1.msra.mxu0 0.0
  %1178 = vmatprep.subr.mxu0 0.0
  %1179 = vmatpush1.msra.mxu0 0.0
  %1180 = vmatprep.subr.mxu0 0.0
  %1181 = vmatpush1.msra.mxu0 0.0
  %1182 = vmatprep.mubr.f32.mxu0 0.0
  %1183 = vmatmul.mubr.f32.gmra.mrb[0].mxu0 %v956
  %v1184 = vpop.f32.mrb[0].mxu0
  %v1185 = vadd.f32 0.0, %v1184
  %v1186 = vpop.f32.mrb[0].mxu0
  %v1187 = vadd.f32 0.0, %v1186
  %1188 = vdwg.mxu0
  %v1189 = vmul.f32 %v1043, %v273
  %v1190 = vmul.f32 %v1045, %v274
  %v1191 = vmul.f32 %v1114, %v275
  %v1192 = vmul.f32 %v1116, %v276
  %v1193 = vmul.f32 %v1185, %v277
  %v1194 = vmul.f32 %v1187, %v278
  %v1195 = vsel %vm613, %v1189, 0.0
  %v1196 = vsel %vm613, %v1190, 0.0
  %v1197 = vadd.f32 %v1195, %v1196
  %v1198 = vsel %vm613, %v1191, 0.0
  %v1199 = vadd.f32 %v1197, %v1198
  %v1200 = vsel %vm613, %v1192, 0.0
  %v1201 = vadd.f32 %v1199, %v1200
  %v1202 = vsel %vm613, %v1193, 0.0
  %v1203 = vadd.f32 %v1201, %v1202
  %v1204 = vsel %vm296, %v1194, 0.0
  %v1205 = vadd.f32 %v1203, %v1204
  %1206 = vadd.xlane.f32.xlu0 %v1205
  %v1207 = vpop.xlane.xlu0 %1206
  %v1208 = vmul.f32 %v1043, %v1043
  %v1209 = vmul.f32 %v1045, %v1045
  %v1210 = vmul.f32 %v1114, %v1114
  %v1211 = vmul.f32 %v1116, %v1116
  %v1212 = vmul.f32 %v1185, %v1185
  %v1213 = vmul.f32 %v1187, %v1187
  %v1214 = vmul.f32 %v1208, %v273
  %v1215 = vmul.f32 %v1209, %v274
  %v1216 = vmul.f32 %v1210, %v275
  %v1217 = vmul.f32 %v1211, %v276
  %v1218 = vmul.f32 %v1212, %v277
  %v1219 = vmul.f32 %v1213, %v278
  %v1220 = vsel %vm613, %v1214, 0.0
  %v1221 = vsel %vm613, %v1215, 0.0
  %v1222 = vadd.f32 %v1220, %v1221
  %v1223 = vsel %vm613, %v1216, 0.0
  %v1224 = vadd.f32 %v1222, %v1223
  %v1225 = vsel %vm613, %v1217, 0.0
  %v1226 = vadd.f32 %v1224, %v1225
  %v1227 = vsel %vm613, %v1218, 0.0
  %v1228 = vadd.f32 %v1226, %v1227
  %v1229 = vsel %vm296, %v1219, 0.0
  %v1230 = vadd.f32 %v1228, %v1229
  %1231 = vadd.xlane.f32.xlu0 %v1230
  %v1232 = vpop.xlane.xlu0 %1231
  %v1233 = vmul.f32 %v1207, 0.001953125
  %v1234 = vmul.f32 %v1232, 0.001953125
  %v1235 = vmul.f32 %v1233, %v1233
  %v1236 = vsub.f32 %v1234, %v1235
  %v1237 = vld [vmem:[%s5] sm:$0xf]
  %v1238 = vadd.f32 %v1236, 1e-05
  %v1239 = vrsqrt.pop %v1238
  %v1240 = vmul.f32 %v1237, %v1239
  %v1241 = vld [vmem:[%s6] sm:$0xf]
  %v1242 = vmul.f32 %v1233, %v1240
  %v1243 = vsub.f32 %v1241, %v1242
  %1245 = vset.pattern.permute.xlu0 0
  %1246 = vperm.xlu0 %1245, %v1240
  %v1247 = vpop.permute.xlu0 %1246
  %v1249 = vmul.f32 %v1247, %v1043
  %v1250 = vmul.f32 %v1247, %v1045
  %v1251 = vmul.f32 %v1247, %v1114
  %v1252 = vmul.f32 %v1247, %v1116
  %v1253 = vmul.f32 %v1247, %v1185
  %v1254 = vmul.f32 %v1247, %v1187
  %1256 = vset.pattern.permute.xlu0 0
  %1257 = vperm.xlu0 %1256, %v1243
  %v1258 = vpop.permute.xlu0 %1257
  %v1260 = vadd.f32 %v1249, %v1258
  %v1261 = vadd.f32 %v1250, %v1258
  %v1262 = vadd.f32 %v1251, %v1258
  %v1263 = vadd.f32 %v1252, %v1258
  %v1264 = vadd.f32 %v1253, %v1258
  %v1265 = vadd.f32 %v1254, %v1258
  %v1266 = vmul.f32 %v1260, %v273
  %v1267 = vmul.f32 %v1261, %v274
  %v1268 = vmul.f32 %v1262, %v275
  %v1269 = vmul.f32 %v1263, %v276
  %v1270 = vmul.f32 %v1264, %v277
  %v1271 = vmul.f32 %v1265, %v278
  %1278 = vrot.lane.b32.xlu0 %v1266, 19
  %v1279 = vpop.permute.xlu0 %1278
  %1280 = vrot.lane.b32.xlu0 %v1267, 19
  %v1281 = vpop.permute.xlu0 %1280
  %1282 = vrot.lane.b32.xlu0 %v1268, 19
  %v1283 = vpop.permute.xlu0 %1282
  %1284 = vrot.lane.b32.xlu0 %v1269, 19
  %v1285 = vpop.permute.xlu0 %1284
  %1286 = vrot.lane.b32.xlu0 %v1270, 19
  %v1287 = vpop.permute.xlu0 %1286
  %1288 = vrot.lane.b32.xlu0 %v1271, 19
  %v1289 = vpop.permute.xlu0 %1288
  %vm1290 = vcmask 154624
  %v1291 = vsel %vm1290, %v1279, %v1281
  %v1292 = vsel %vm1290, %v1281, %v1283
  %v1293 = vsel %vm1290, %v1283, %v1285
  %v1294 = vsel %vm1290, %v1285, %v1287
  %v1295 = vsel %vm1290, %v1287, %v1289
  %v1302 = vsel %vm1290, 0.0, %v1279
  %vm1303 = vcmask 515072
  %v1304 = vsel %vm1303, %v1295, 0.0
  %1305 = vst [vmem:[#allocation2] sm:$0xf] %v1302
  %1306 = vst [vmem:[#allocation2 + $0x8] sm:$0xf] %v1291
  %1307 = vst [vmem:[#allocation2 + $0x10] sm:$0xf] %v1292
  %1308 = vst [vmem:[#allocation2 + $0x18] sm:$0xf] %v1293
  %1309 = vst [vmem:[#allocation2 + $0x20] sm:$0xf] %v1294
  %1310 = vst.msk [vmem:[#allocation2 + $0x28] sm:$0xf] %vm296, %v1304
  %v1313 = vrot.slane %v1302, 4
  %v1314 = vrot.slane %v1291, 4
  %v1315 = vrot.slane %v1292, 4
  %v1316 = vrot.slane %v1293, 4
  %v1317 = vrot.slane %v1294, 4
  %v1318 = vrot.slane %v1304, 4
  %1319 = vrot.lane.b32.xlu0 %v1313, 127
  %v1320 = vpop.permute.xlu0 %1319
  %1321 = vrot.lane.b32.xlu0 %v1314, 127
  %v1322 = vpop.permute.xlu0 %1321
  %1323 = vrot.lane.b32.xlu0 %v1315, 127
  %v1324 = vpop.permute.xlu0 %1323
  %1325 = vrot.lane.b32.xlu0 %v1316, 127
  %v1326 = vpop.permute.xlu0 %1325
  %1327 = vrot.lane.b32.xlu0 %v1317, 127
  %v1328 = vpop.permute.xlu0 %1327
  %1329 = vrot.lane.b32.xlu0 %v1318, 127
  %v1330 = vpop.permute.xlu0 %1329
  %v1331 = vsel %vm313, %v1320, %v1322
  %v1332 = vsel %vm313, %v1322, %v1324
  %v1333 = vsel %vm313, %v1324, %v1326
  %v1334 = vsel %vm313, %v1326, %v1328
  %v1335 = vsel %vm313, %v1328, %v1330
  %1342 = vst [vmem:[#allocation2] sm:$0xf0] %v1331
  %1343 = vst [vmem:[#allocation2 + $0x8] sm:$0xf0] %v1332
  %1344 = vst [vmem:[#allocation2 + $0x10] sm:$0xf0] %v1333
  %1345 = vst [vmem:[#allocation2 + $0x18] sm:$0xf0] %v1334
  %1346 = vst [vmem:[#allocation2 + $0x20] sm:$0xf0] %v1335
  %1347 = vst.msk [vmem:[#allocation2 + $0x28] sm:$0xf0] %vm330, %v1330
  %1348 = vrot.lane.b32.xlu0 %v1302, 126
  %v1349 = vpop.permute.xlu0 %1348
  %1350 = vrot.lane.b32.xlu0 %v1291, 126
  %v1351 = vpop.permute.xlu0 %1350
  %1352 = vrot.lane.b32.xlu0 %v1292, 126
  %v1353 = vpop.permute.xlu0 %1352
  %1354 = vrot.lane.b32.xlu0 %v1293, 126
  %v1355 = vpop.permute.xlu0 %1354
  %1356 = vrot.lane.b32.xlu0 %v1294, 126
  %v1357 = vpop.permute.xlu0 %1356
  %1358 = vrot.lane.b32.xlu0 %v1304, 126
  %v1359 = vpop.permute.xlu0 %1358
  %v1360 = vsel %vm344, %v1349, %v1351
  %v1361 = vsel %vm344, %v1351, %v1353
  %v1362 = vsel %vm344, %v1353, %v1355
  %v1363 = vsel %vm344, %v1355, %v1357
  %v1364 = vsel %vm344, %v1357, %v1359
  %1371 = vst [vmem:[#allocation2 + $0x30] sm:$0xf] %v1360
  %1372 = vst [vmem:[#allocation2 + $0x38] sm:$0xf] %v1361
  %1373 = vst [vmem:[#allocation2 + $0x40] sm:$0xf] %v1362
  %1374 = vst [vmem:[#allocation2 + $0x48] sm:$0xf] %v1363
  %1375 = vst [vmem:[#allocation2 + $0x50] sm:$0xf] %v1364
  %1376 = vst.msk [vmem:[#allocation2 + $0x58] sm:$0xf] %vm296, %v1359
  %1377 = vrot.lane.b32.xlu0 %v1313, 110
  %v1378 = vpop.permute.xlu0 %1377
  %1379 = vrot.lane.b32.xlu0 %v1314, 110
  %v1380 = vpop.permute.xlu0 %1379
  %1381 = vrot.lane.b32.xlu0 %v1315, 110
  %v1382 = vpop.permute.xlu0 %1381
  %1383 = vrot.lane.b32.xlu0 %v1316, 110
  %v1384 = vpop.permute.xlu0 %1383
  %1385 = vrot.lane.b32.xlu0 %v1317, 110
  %v1386 = vpop.permute.xlu0 %1385
  %1387 = vrot.lane.b32.xlu0 %v1318, 110
  %v1388 = vpop.permute.xlu0 %1387
  %v1389 = vsel %vm374, %v1378, %v1380
  %v1390 = vsel %vm374, %v1380, %v1382
  %v1391 = vsel %vm374, %v1382, %v1384
  %v1392 = vsel %vm374, %v1384, %v1386
  %v1393 = vsel %vm374, %v1386, %v1388
  %1400 = vst [vmem:[#allocation2 + $0x30] sm:$0xf0] %v1389
  %1401 = vst [vmem:[#allocation2 + $0x38] sm:$0xf0] %v1390
  %1402 = vst [vmem:[#allocation2 + $0x40] sm:$0xf0] %v1391
  %1403 = vst [vmem:[#allocation2 + $0x48] sm:$0xf0] %v1392
  %1404 = vst [vmem:[#allocation2 + $0x50] sm:$0xf0] %v1393
  %1405 = vst.msk [vmem:[#allocation2 + $0x58] sm:$0xf0] %vm330, %v1388
  %1406 = vrot.lane.b32.xlu0 %v1302, 109
  %v1407 = vpop.permute.xlu0 %1406
  %1408 = vrot.lane.b32.xlu0 %v1291, 109
  %v1409 = vpop.permute.xlu0 %1408
  %1410 = vrot.lane.b32.xlu0 %v1292, 109
  %v1411 = vpop.permute.xlu0 %1410
  %1412 = vrot.lane.b32.xlu0 %v1293, 109
  %v1413 = vpop.permute.xlu0 %1412
  %1414 = vrot.lane.b32.xlu0 %v1294, 109
  %v1415 = vpop.permute.xlu0 %1414
  %1416 = vrot.lane.b32.xlu0 %v1304, 109
  %v1417 = vpop.permute.xlu0 %1416
  %v1418 = vsel %vm404, %v1407, %v1409
  %v1419 = vsel %vm404, %v1409, %v1411
  %v1420 = vsel %vm404, %v1411, %v1413
  %v1421 = vsel %vm404, %v1413, %v1415
  %v1422 = vsel %vm404, %v1415, %v1417
  %1429 = vst [vmem:[#allocation2 + $0x60] sm:$0xf] %v1418
  %1430 = vst [vmem:[#allocation2 + $0x68] sm:$0xf] %v1419
  %1431 = vst [vmem:[#allocation2 + $0x70] sm:$0xf] %v1420
  %1432 = vst [vmem:[#allocation2 + $0x78] sm:$0xf] %v1421
  %1433 = vst [vmem:[#allocation2 + $0x80] sm:$0xf] %v1422
  %1434 = vst.msk [vmem:[#allocation2 + $0x88] sm:$0xf] %vm296, %v1417
  %1435 = vrot.lane.b32.xlu0 %v1313, 108
  %v1436 = vpop.permute.xlu0 %1435
  %1437 = vrot.lane.b32.xlu0 %v1314, 108
  %v1438 = vpop.permute.xlu0 %1437
  %1439 = vrot.lane.b32.xlu0 %v1315, 108
  %v1440 = vpop.permute.xlu0 %1439
  %1441 = vrot.lane.b32.xlu0 %v1316, 108
  %v1442 = vpop.permute.xlu0 %1441
  %1443 = vrot.lane.b32.xlu0 %v1317, 108
  %v1444 = vpop.permute.xlu0 %1443
  %1445 = vrot.lane.b32.xlu0 %v1318, 108
  %v1446 = vpop.permute.xlu0 %1445
  %v1447 = vsel %vm434, %v1436, %v1438
  %v1448 = vsel %vm434, %v1438, %v1440
  %v1449 = vsel %vm434, %v1440, %v1442
  %v1450 = vsel %vm434, %v1442, %v1444
  %v1451 = vsel %vm434, %v1444, %v1446
  %1458 = vst [vmem:[#allocation2 + $0x60] sm:$0xf0] %v1447
  %1459 = vst [vmem:[#allocation2 + $0x68] sm:$0xf0] %v1448
  %1460 = vst [vmem:[#allocation2 + $0x70] sm:$0xf0] %v1449
  %1461 = vst [vmem:[#allocation2 + $0x78] sm:$0xf0] %v1450
  %1462 = vst [vmem:[#allocation2 + $0x80] sm:$0xf0] %v1451
  %1463 = vst.msk [vmem:[#allocation2 + $0x88] sm:$0xf0] %vm330, %v1446
  %1464 = vrot.lane.b32.xlu0 %v1302, 92
  %v1465 = vpop.permute.xlu0 %1464
  %1466 = vrot.lane.b32.xlu0 %v1291, 92
  %v1467 = vpop.permute.xlu0 %1466
  %1468 = vrot.lane.b32.xlu0 %v1292, 92
  %v1469 = vpop.permute.xlu0 %1468
  %1470 = vrot.lane.b32.xlu0 %v1293, 92
  %v1471 = vpop.permute.xlu0 %1470
  %1472 = vrot.lane.b32.xlu0 %v1294, 92
  %v1473 = vpop.permute.xlu0 %1472
  %1474 = vrot.lane.b32.xlu0 %v1304, 92
  %v1475 = vpop.permute.xlu0 %1474
  %v1476 = vsel %vm464, %v1465, %v1467
  %v1477 = vsel %vm464, %v1467, %v1469
  %v1478 = vsel %vm464, %v1469, %v1471
  %v1479 = vsel %vm464, %v1471, %v1473
  %v1480 = vsel %vm464, %v1473, %v1475
  %1487 = vst [vmem:[#allocation2 + $0x90] sm:$0xf] %v1476
  %1488 = vst [vmem:[#allocation2 + $0x98] sm:$0xf] %v1477
  %1489 = vst [vmem:[#allocation2 + $0xa0] sm:$0xf] %v1478
  %1490 = vst [vmem:[#allocation2 + $0xa8] sm:$0xf] %v1479
  %1491 = vst [vmem:[#allocation2 + $0xb0] sm:$0xf] %v1480
  %1492 = vst.msk [vmem:[#allocation2 + $0xb8] sm:$0xf] %vm296, %v1475
  %1493 = vrot.lane.b32.xlu0 %v1313, 91
  %v1494 = vpop.permute.xlu0 %1493
  %1495 = vrot.lane.b32.xlu0 %v1314, 91
  %v1496 = vpop.permute.xlu0 %1495
  %1497 = vrot.lane.b32.xlu0 %v1315, 91
  %v1498 = vpop.permute.xlu0 %1497
  %1499 = vrot.lane.b32.xlu0 %v1316, 91
  %v1500 = vpop.permute.xlu0 %1499
  %1501 = vrot.lane.b32.xlu0 %v1317, 91
  %v1502 = vpop.permute.xlu0 %1501
  %1503 = vrot.lane.b32.xlu0 %v1318, 91
  %v1504 = vpop.permute.xlu0 %1503
  %v1505 = vsel %vm494, %v1494, %v1496
  %v1506 = vsel %vm494, %v1496, %v1498
  %v1507 = vsel %vm494, %v1498, %v1500
  %v1508 = vsel %vm494, %v1500, %v1502
  %v1509 = vsel %vm494, %v1502, %v1504
  %1516 = vst [vmem:[#allocation2 + $0x90] sm:$0xf0] %v1505
  %1517 = vst [vmem:[#allocation2 + $0x98] sm:$0xf0] %v1506
  %1518 = vst [vmem:[#allocation2 + $0xa0] sm:$0xf0] %v1507
  %1519 = vst [vmem:[#allocation2 + $0xa8] sm:$0xf0] %v1508
  %1520 = vst [vmem:[#allocation2 + $0xb0] sm:$0xf0] %v1509
  %1521 = vst.msk [vmem:[#allocation2 + $0xb8] sm:$0xf0] %vm330, %v1504
  %1522 = vrot.lane.b32.xlu0 %v1302, 90
  %v1523 = vpop.permute.xlu0 %1522
  %1524 = vrot.lane.b32.xlu0 %v1291, 90
  %v1525 = vpop.permute.xlu0 %1524
  %1526 = vrot.lane.b32.xlu0 %v1292, 90
  %v1527 = vpop.permute.xlu0 %1526
  %1528 = vrot.lane.b32.xlu0 %v1293, 90
  %v1529 = vpop.permute.xlu0 %1528
  %1530 = vrot.lane.b32.xlu0 %v1294, 90
  %v1531 = vpop.permute.xlu0 %1530
  %1532 = vrot.lane.b32.xlu0 %v1304, 90
  %v1533 = vpop.permute.xlu0 %1532
  %v1534 = vsel %vm524, %v1523, %v1525
  %v1535 = vsel %vm524, %v1525, %v1527
  %v1536 = vsel %vm524, %v1527, %v1529
  %v1537 = vsel %vm524, %v1529, %v1531
  %v1538 = vsel %vm524, %v1531, %v1533
  %1545 = vst [vmem:[#allocation2 + $0xc0] sm:$0xf] %v1534
  %1546 = vst [vmem:[#allocation2 + $0xc8] sm:$0xf] %v1535
  %1547 = vst [vmem:[#allocation2 + $0xd0] sm:$0xf] %v1536
  %1548 = vst [vmem:[#allocation2 + $0xd8] sm:$0xf] %v1537
  %1549 = vst [vmem:[#allocation2 + $0xe0] sm:$0xf] %v1538
  %1550 = vst.msk [vmem:[#allocation2 + $0xe8] sm:$0xf] %vm296, %v1533
  %v1551 = vld [vmem:[%s2] sm:$0xff]
  %v1552 = vld [vmem:[%s2 + $0x8] sm:$0xff]
  %v1553 = vld [vmem:[%s2 + $0x10] sm:$0xff]
  %v1554 = vld [vmem:[%s2 + $0x18] sm:$0xff]
  %v1555 = vld [vmem:[#allocation2] sm:$0xff]
  %v1556 = vld [vmem:[#allocation2 + $0x8] sm:$0xff]
  %v1557 = vld [vmem:[#allocation2 + $0x10] sm:$0xff]
  %v1558 = vld [vmem:[#allocation2 + $0x18] sm:$0xff]
  %v1559 = vld [vmem:[#allocation2 + $0x20] sm:$0xff]
  %v1560 = vld [vmem:[#allocation2 + $0x28] sm:$0xff]
  %v1561 = vld [vmem:[#allocation2 + $0x30] sm:$0xff]
  %v1562 = vld [vmem:[#allocation2 + $0x38] sm:$0xff]
  %v1563 = vld [vmem:[#allocation2 + $0x40] sm:$0xff]
  %v1564 = vld [vmem:[#allocation2 + $0x48] sm:$0xff]
  %v1565 = vld [vmem:[#allocation2 + $0x50] sm:$0xff]
  %v1566 = vld [vmem:[#allocation2 + $0x58] sm:$0xff]
  %v1567 = vld [vmem:[#allocation2 + $0x60] sm:$0xff]
  %v1568 = vld [vmem:[#allocation2 + $0x68] sm:$0xff]
  %v1569 = vld [vmem:[#allocation2 + $0x70] sm:$0xff]
  %v1570 = vld [vmem:[#allocation2 + $0x78] sm:$0xff]
  %v1571 = vld [vmem:[#allocation2 + $0x80] sm:$0xff]
  %v1572 = vld [vmem:[#allocation2 + $0x88] sm:$0xff]
  %v1573 = vld [vmem:[#allocation2 + $0x90] sm:$0xff]
  %v1574 = vld [vmem:[#allocation2 + $0x98] sm:$0xff]
  %v1575 = vld [vmem:[#allocation2 + $0xa0] sm:$0xff]
  %v1576 = vld [vmem:[#allocation2 + $0xa8] sm:$0xff]
  %v1577 = vld [vmem:[#allocation2 + $0xb0] sm:$0xff]
  %v1578 = vld [vmem:[#allocation2 + $0xb8] sm:$0xff]
  %v1579 = vld [vmem:[#allocation2 + $0xc0] sm:$0xf]
  %v1580 = vld [vmem:[#allocation2 + $0xc8] sm:$0xf]
  %v1581 = vld [vmem:[#allocation2 + $0xd0] sm:$0xf]
  %v1582 = vld [vmem:[#allocation2 + $0xd8] sm:$0xf]
  %v1583 = vld [vmem:[#allocation2 + $0xe0] sm:$0xf]
  %v1584 = vld [vmem:[#allocation2 + $0xe8] sm:$0xf]
  %v1586 = vsel %vm600, %v1551, 0
  %v1589 = vsel %vm600, %v1552, 0
  %v1592 = vsel %vm600, %v1553, 0
  %v1595 = vsel %vm600, %v1554, 0
  %v1598 = vsel %vm613, %v1579, 0
  %v1601 = vsel %vm613, %v1580, 0
  %v1604 = vsel %vm613, %v1581, 0
  %v1607 = vsel %vm613, %v1582, 0
  %v1610 = vsel %vm613, %v1583, 0
  %v1613 = vsel %vm613, %v1584, 0
  %1615 = vmatprep.subr.mxu0 %v1556
  %1616 = vmatpush1.msra.mxu0 %v1555
  %1617 = vmatprep.subr.mxu0 %v1562
  %1618 = vmatpush1.msra.mxu0 %v1561
  %1619 = vmatprep.subr.mxu0 %v1568
  %1620 = vmatpush1.msra.mxu0 %v1567
  %1621 = vmatprep.subr.mxu0 %v1574
  %1622 = vmatpush1.msra.mxu0 %v1573
  %1623 = vmatprep.subr.mxu0 %v1601
  %1624 = vmatpush1.msra.mxu0 %v1598
  %1625 = vmatprep.subr.mxu0 0.0
  %1626 = vmatpush1.msra.mxu0 0.0
  %1627 = vmatprep.subr.mxu0 0.0
  %1628 = vmatpush1.msra.mxu0 0.0
  %1629 = vmatprep.subr.mxu0 0.0
  %1630 = vmatpush1.msra.mxu0 0.0
  %1631 = vmatprep.subr.mxu0 0.0
  %1632 = vmatpush1.msra.mxu0 0.0
  %1633 = vmatprep.subr.mxu0 0.0
  %1634 = vmatpush1.msra.mxu0 0.0
  %1635 = vmatprep.subr.mxu0 0.0
  %1636 = vmatpush1.msra.mxu0 0.0
  %1637 = vmatprep.subr.mxu0 0.0
  %1638 = vmatpush1.msra.mxu0 0.0
  %1639 = vmatprep.subr.mxu0 0.0
  %1640 = vmatpush1.msra.mxu0 0.0
  %1641 = vmatprep.subr.mxu0 0.0
  %1642 = vmatpush1.msra.mxu0 0.0
  %1643 = vmatprep.subr.mxu0 0.0
  %1644 = vmatpush1.msra.mxu0 0.0
  %1645 = vmatprep.subr.mxu0 0.0
  %1646 = vmatpush1.msra.mxu0 0.0
  %1647 = vmatprep.subr.mxu0 0.0
  %1648 = vmatpush1.msra.mxu0 0.0
  %1649 = vmatprep.subr.mxu0 0.0
  %1650 = vmatpush1.msra.mxu0 0.0
  %1651 = vmatprep.subr.mxu0 0.0
  %1652 = vmatpush1.msra.mxu0 0.0
  %1653 = vmatprep.subr.mxu0 0.0
  %1654 = vmatpush1.msra.mxu0 0.0
  %1655 = vmatprep.subr.mxu0 0.0
  %1656 = vmatpush1.msra.mxu0 0.0
  %1657 = vmatprep.subr.mxu0 0.0
  %1658 = vmatpush1.msra.mxu0 0.0
  %1659 = vmatprep.subr.mxu0 0.0
  %1660 = vmatpush1.msra.mxu0 0.0
  %1661 = vmatprep.subr.mxu0 0.0
  %1662 = vmatpush1.msra.mxu0 0.0
  %1663 = vmatprep.subr.mxu0 0.0
  %1664 = vmatpush1.msra.mxu0 0.0
  %1665 = vmatprep.subr.mxu0 0.0
  %1666 = vmatpush1.msra.mxu0 0.0
  %1667 = vmatprep.subr.mxu0 0.0
  %1668 = vmatpush1.msra.mxu0 0.0
  %1669 = vmatprep.subr.mxu0 0.0
  %1670 = vmatpush1.msra.mxu0 0.0
  %1671 = vmatprep.subr.mxu0 0.0
  %1672 = vmatpush1.msra.mxu0 0.0
  %1673 = vmatprep.subr.mxu0 0.0
  %1674 = vmatpush1.msra.mxu0 0.0
  %1675 = vmatprep.subr.mxu0 0.0
  %1676 = vmatpush1.msra.mxu0 0.0
  %1677 = vmatprep.subr.mxu0 0.0
  %1678 = vmatpush1.msra.mxu0 0.0
  %1679 = vmatprep.mubr.f32.mxu0 0.0
  %1680 = vmatmul.mubr.f32.gmra.mrb[0].mxu0 %v1586
  %v1681 = vpop.f32.mrb[0].mxu0
  %v1682 = vadd.f32 0.0, %v1681
  %v1683 = vpop.f32.mrb[0].mxu0
  %v1684 = vadd.f32 0.0, %v1683
  %1685 = vmatprep.mubr.f32.mxu0 0.0
  %1686 = vmatmul.mubr.f32.gmra.mrb[0].mxu0 %v1589
  %v1687 = vpop.f32.mrb[0].mxu0
  %v1688 = vadd.f32 0.0, %v1687
  %v1689 = vpop.f32.mrb[0].mxu0
  %v1690 = vadd.f32 0.0, %v1689
  %1691 = vmatprep.mubr.f32.mxu0 0.0
  %1692 = vmatmul.mubr.f32.gmra.mrb[0].mxu0 %v1592
  %v1693 = vpop.f32.mrb[0].mxu0
  %v1694 = vadd.f32 0.0, %v1693
  %v1695 = vpop.f32.mrb[0].mxu0
  %v1696 = vadd.f32 0.0, %v1695
  %1697 = vmatprep.mubr.f32.mxu0 0.0
  %1698 = vmatmul.mubr.f32.gmra.mrb[0].mxu0 %v1595
  %v1699 = vpop.f32.mrb[0].mxu0
  %v1700 = vadd.f32 0.0, %v1699
  %v1701 = vpop.f32.mrb[0].mxu0
  %v1702 = vadd.f32 0.0, %v1701
  %1703 = vdwg.mxu0
  %1704 = vmatprep.subr.mxu0 %v1558
  %1705 = vmatpush1.msra.mxu0 %v1557
  %1706 = vmatprep.subr.mxu0 %v1564
  %1707 = vmatpush1.msra.mxu0 %v1563
  %1708 = vmatprep.subr.mxu0 %v1570
  %1709 = vmatpush1.msra.mxu0 %v1569
  %1710 = vmatprep.subr.mxu0 %v1576
  %1711 = vmatpush1.msra.mxu0 %v1575
  %1712 = vmatprep.subr.mxu0 %v1607
  %1713 = vmatpush1.msra.mxu0 %v1604
  %1714 = vmatprep.subr.mxu0 0.0
  %1715 = vmatpush1.msra.mxu0 0.0
  %1716 = vmatprep.subr.mxu0 0.0
  %1717 = vmatpush1.msra.mxu0 0.0
  %1718 = vmatprep.subr.mxu0 0.0
  %1719 = vmatpush1.msra.mxu0 0.0
  %1720 = vmatprep.subr.mxu0 0.0
  %1721 = vmatpush1.msra.mxu0 0.0
  %1722 = vmatprep.subr.mxu0 0.0
  %1723 = vmatpush1.msra.mxu0 0.0
  %1724 = vmatprep.subr.mxu0 0.0
  %1725 = vmatpush1.msra.mxu0 0.0
  %1726 = vmatprep.subr.mxu0 0.0
  %1727 = vmatpush1.msra.mxu0 0.0
  %1728 = vmatprep.subr.mxu0 0.0
  %1729 = vmatpush1.msra.mxu0 0.0
  %1730 = vmatprep.subr.mxu0 0.0
  %1731 = vmatpush1.msra.mxu0 0.0
  %1732 = vmatprep.subr.mxu0 0.0
  %1733 = vmatpush1.msra.mxu0 0.0
  %1734 = vmatprep.subr.mxu0 0.0
  %1735 = vmatpush1.msra.mxu0 0.0
  %1736 = vmatprep.subr.mxu0 0.0
  %1737 = vmatpush1.msra.mxu0 0.0
  %1738 = vmatprep.subr.mxu0 0.0
  %1739 = vmatpush1.msra.mxu0 0.0
  %1740 = vmatprep.subr.mxu0 0.0
  %1741 = vmatpush1.msra.mxu0 0.0
  %1742 = vmatprep.subr.mxu0 0.0
  %1743 = vmatpush1.msra.mxu0 0.0
  %1744 = vmatprep.subr.mxu0 0.0
  %1745 = vmatpush1.msra.mxu0 0.0
  %1746 = vmatprep.subr.mxu0 0.0
  %1747 = vmatpush1.msra.mxu0 0.0
  %1748 = vmatprep.subr.mxu0 0.0
  %1749 = vmatpush1.msra.mxu0 0.0
  %1750 = vmatprep.subr.mxu0 0.0
  %1751 = vmatpush1.msra.mxu0 0.0
  %1752 = vmatprep.subr.mxu0 0.0
  %1753 = vmatpush1.msra.mxu0 0.0
  %1754 = vmatprep.subr.mxu0 0.0
  %1755 = vmatpush1.msra.mxu0 0.0
  %1756 = vmatprep.subr.mxu0 0.0
  %1757 = vmatpush1.msra.mxu0 0.0
  %1758 = vmatprep.subr.mxu0 0.0
  %1759 = vmatpush1.msra.mxu0 0.0
  %1760 = vmatprep.subr.mxu0 0.0
  %1761 = vmatpush1.msra.mxu0 0.0
  %1762 = vmatprep.subr.mxu0 0.0
  %1763 = vmatpush1.msra.mxu0 0.0
  %1764 = vmatprep.subr.mxu0 0.0
  %1765 = vmatpush1.msra.mxu0 0.0
  %1766 = vmatprep.subr.mxu0 0.0
  %1767 = vmatpush1.msra.mxu0 0.0
  %1768 = vmatprep.mubr.f32.mxu0 0.0
  %1769 = vmatmul.mubr.f32.gmra.mrb[0].mxu0 %v1586
  %v1770 = vpop.f32.mrb[0].mxu0
  %v1771 = vadd.f32 0.0, %v1770
  %v1772 = vpop.f32.mrb[0].mxu0
  %v1773 = vadd.f32 0.0, %v1772
  %1774 = vmatprep.mubr.f32.mxu0 0.0
  %1775 = vmatmul.mubr.f32.gmra.mrb[0].mxu0 %v1589
  %v1776 = vpop.f32.mrb[0].mxu0
  %v1777 = vadd.f32 0.0, %v1776
  %v1778 = vpop.f32.mrb[0].mxu0
  %v1779 = vadd.f32 0.0, %v1778
  %1780 = vmatprep.mubr.f32.mxu0 0.0
  %1781 = vmatmul.mubr.f32.gmra.mrb[0].mxu0 %v1592
  %v1782 = vpop.f32.mrb[0].mxu0
  %v1783 = vadd.f32 0.0, %v1782
  %v1784 = vpop.f32.mrb[0].mxu0
  %v1785 = vadd.f32 0.0, %v1784
  %1786 = vmatprep.mubr.f32.mxu0 0.0
  %1787 = vmatmul.mubr.f32.gmra.mrb[0].mxu0 %v1595
  %v1788 = vpop.f32.mrb[0].mxu0
  %v1789 = vadd.f32 0.0, %v1788
  %v1790 = vpop.f32.mrb[0].mxu0
  %v1791 = vadd.f32 0.0, %v1790
  %1792 = vdwg.mxu0
  %1793 = vmatprep.subr.mxu0 %v1560
  %1794 = vmatpush1.msra.mxu0 %v1559
  %1795 = vmatprep.subr.mxu0 %v1566
  %1796 = vmatpush1.msra.mxu0 %v1565
  %1797 = vmatprep.subr.mxu0 %v1572
  %1798 = vmatpush1.msra.mxu0 %v1571
  %1799 = vmatprep.subr.mxu0 %v1578
  %1800 = vmatpush1.msra.mxu0 %v1577
  %1801 = vmatprep.subr.mxu0 %v1613
  %1802 = vmatpush1.msra.mxu0 %v1610
  %1803 = vmatprep.subr.mxu0 0.0
  %1804 = vmatpush1.msra.mxu0 0.0
  %1805 = vmatprep.subr.mxu0 0.0
  %1806 = vmatpush1.msra.mxu0 0.0
  %1807 = vmatprep.subr.mxu0 0.0
  %1808 = vmatpush1.msra.mxu0 0.0
  %1809 = vmatprep.subr.mxu0 0.0
  %1810 = vmatpush1.msra.mxu0 0.0
  %1811 = vmatprep.subr.mxu0 0.0
  %1812 = vmatpush1.msra.mxu0 0.0
  %1813 = vmatprep.subr.mxu0 0.0
  %1814 = vmatpush1.msra.mxu0 0.0
  %1815 = vmatprep.subr.mxu0 0.0
  %1816 = vmatpush1.msra.mxu0 0.0
  %1817 = vmatprep.subr.mxu0 0.0
  %1818 = vmatpush1.msra.mxu0 0.0
  %1819 = vmatprep.subr.mxu0 0.0
  %1820 = vmatpush1.msra.mxu0 0.0
  %1821 = vmatprep.subr.mxu0 0.0
  %1822 = vmatpush1.msra.mxu0 0.0
  %1823 = vmatprep.subr.mxu0 0.0
  %1824 = vmatpush1.msra.mxu0 0.0
  %1825 = vmatprep.subr.mxu0 0.0
  %1826 = vmatpush1.msra.mxu0 0.0
  %1827 = vmatprep.subr.mxu0 0.0
  %1828 = vmatpush1.msra.mxu0 0.0
  %1829 = vmatprep.subr.mxu0 0.0
  %1830 = vmatpush1.msra.mxu0 0.0
  %1831 = vmatprep.subr.mxu0 0.0
  %1832 = vmatpush1.msra.mxu0 0.0
  %1833 = vmatprep.subr.mxu0 0.0
  %1834 = vmatpush1.msra.mxu0 0.0
  %1835 = vmatprep.subr.mxu0 0.0
  %1836 = vmatpush1.msra.mxu0 0.0
  %1837 = vmatprep.subr.mxu0 0.0
  %1838 = vmatpush1.msra.mxu0 0.0
  %1839 = vmatprep.subr.mxu0 0.0
  %1840 = vmatpush1.msra.mxu0 0.0
  %1841 = vmatprep.subr.mxu0 0.0
  %1842 = vmatpush1.msra.mxu0 0.0
  %1843 = vmatprep.subr.mxu0 0.0
  %1844 = vmatpush1.msra.mxu0 0.0
  %1845 = vmatprep.subr.mxu0 0.0
  %1846 = vmatpush1.msra.mxu0 0.0
  %1847 = vmatprep.subr.mxu0 0.0
  %1848 = vmatpush1.msra.mxu0 0.0
  %1849 = vmatprep.subr.mxu0 0.0
  %1850 = vmatpush1.msra.mxu0 0.0
  %1851 = vmatprep.subr.mxu0 0.0
  %1852 = vmatpush1.msra.mxu0 0.0
  %1853 = vmatprep.subr.mxu0 0.0
  %1854 = vmatpush1.msra.mxu0 0.0
  %1855 = vmatprep.subr.mxu0 0.0
  %1856 = vmatpush1.msra.mxu0 0.0
  %1857 = vmatprep.mubr.f32.mxu0 0.0
  %1858 = vmatmul.mubr.f32.gmra.mrb[0].mxu0 %v1586
  %v1859 = vpop.f32.mrb[0].mxu0
  %v1860 = vadd.f32 0.0, %v1859
  %v1861 = vpop.f32.mrb[0].mxu0
  %v1862 = vadd.f32 0.0, %v1861
  %1863 = vmatprep.mubr.f32.mxu0 0.0
  %1864 = vmatmul.mubr.f32.gmra.mrb[0].mxu0 %v1589
  %v1865 = vpop.f32.mrb[0].mxu0
  %v1866 = vadd.f32 0.0, %v1865
  %v1867 = vpop.f32.mrb[0].mxu0
  %v1868 = vadd.f32 0.0, %v1867
  %1869 = vmatprep.mubr.f32.mxu0 0.0
  %1870 = vmatmul.mubr.f32.gmra.mrb[0].mxu0 %v1592
  %v1871 = vpop.f32.mrb[0].mxu0
  %v1872 = vadd.f32 0.0, %v1871
  %v1873 = vpop.f32.mrb[0].mxu0
  %v1874 = vadd.f32 0.0, %v1873
  %1875 = vmatprep.mubr.f32.mxu0 0.0
  %1876 = vmatmul.mubr.f32.gmra.mrb[0].mxu0 %v1595
  %v1877 = vpop.f32.mrb[0].mxu0
  %v1878 = vadd.f32 0.0, %v1877
  %v1879 = vpop.f32.mrb[0].mxu0
  %v1880 = vadd.f32 0.0, %v1879
  %1881 = vdwg.mxu0
  %v1882 = vmul.f32 %v1682, %v273
  %v1883 = vmul.f32 %v1684, %v274
  %v1884 = vmul.f32 %v1771, %v275
  %v1885 = vmul.f32 %v1773, %v276
  %v1886 = vmul.f32 %v1860, %v277
  %v1887 = vmul.f32 %v1862, %v278
  %v1888 = vmul.f32 %v1688, %v273
  %v1889 = vmul.f32 %v1690, %v274
  %v1890 = vmul.f32 %v1777, %v275
  %v1891 = vmul.f32 %v1779, %v276
  %v1892 = vmul.f32 %v1866, %v277
  %v1893 = vmul.f32 %v1868, %v278
  %v1894 = vmul.f32 %v1694, %v273
  %v1895 = vmul.f32 %v1696, %v274
  %v1896 = vmul.f32 %v1783, %v275
  %v1897 = vmul.f32 %v1785, %v276
  %v1898 = vmul.f32 %v1872, %v277
  %v1899 = vmul.f32 %v1874, %v278
  %v1900 = vmul.f32 %v1700, %v273
  %v1901 = vmul.f32 %v1702, %v274
  %v1902 = vmul.f32 %v1789, %v275
  %v1903 = vmul.f32 %v1791, %v276
  %v1904 = vmul.f32 %v1878, %v277
  %v1905 = vmul.f32 %v1880, %v278
  %v1906 = vadd.f32 %v1882, %v1883
  %v1907 = vadd.f32 %v1906, %v1884
  %v1908 = vadd.f32 %v1907, %v1885
  %v1909 = vadd.f32 %v1908, %v1886
  %v1910 = vsel %vm904, %v1887, 0.0
  %v1911 = vadd.f32 %v1909, %v1910
  %1912 = vadd.xlane.f32.xlu0 %v1911
  %v1913 = vpop.xlane.xlu0 %1912
  %v1914 = vadd.f32 %v1888, %v1889
  %v1915 = vadd.f32 %v1914, %v1890
  %v1916 = vadd.f32 %v1915, %v1891
  %v1917 = vadd.f32 %v1916, %v1892
  %v1918 = vsel %vm904, %v1893, 0.0
  %v1919 = vadd.f32 %v1917, %v1918
  %1920 = vadd.xlane.f32.xlu0 %v1919
  %v1921 = vpop.xlane.xlu0 %1920
  %v1922 = vadd.f32 %v1894, %v1895
  %v1923 = vadd.f32 %v1922, %v1896
  %v1924 = vadd.f32 %v1923, %v1897
  %v1925 = vadd.f32 %v1924, %v1898
  %v1926 = vsel %vm904, %v1899, 0.0
  %v1927 = vadd.f32 %v1925, %v1926
  %1928 = vadd.xlane.f32.xlu0 %v1927
  %v1929 = vpop.xlane.xlu0 %1928
  %v1930 = vadd.f32 %v1900, %v1901
  %v1931 = vadd.f32 %v1930, %v1902
  %v1932 = vadd.f32 %v1931, %v1903
  %v1933 = vadd.f32 %v1932, %v1904
  %v1934 = vsel %vm904, %v1905, 0.0
  %v1935 = vadd.f32 %v1933, %v1934
  %1936 = vadd.xlane.f32.xlu0 %v1935
  %v1937 = vpop.xlane.xlu0 %1936
  %v1938 = vmul.f32 %v1682, %v1682
  %v1939 = vmul.f32 %v1684, %v1684
  %v1940 = vmul.f32 %v1771, %v1771
  %v1941 = vmul.f32 %v1773, %v1773
  %v1942 = vmul.f32 %v1860, %v1860
  %v1943 = vmul.f32 %v1862, %v1862
  %v1944 = vmul.f32 %v1688, %v1688
  %v1945 = vmul.f32 %v1690, %v1690
  %v1946 = vmul.f32 %v1777, %v1777
  %v1947 = vmul.f32 %v1779, %v1779
  %v1948 = vmul.f32 %v1866, %v1866
  %v1949 = vmul.f32 %v1868, %v1868
  %v1950 = vmul.f32 %v1694, %v1694
  %v1951 = vmul.f32 %v1696, %v1696
  %v1952 = vmul.f32 %v1783, %v1783
  %v1953 = vmul.f32 %v1785, %v1785
  %v1954 = vmul.f32 %v1872, %v1872
  %v1955 = vmul.f32 %v1874, %v1874
  %v1956 = vmul.f32 %v1700, %v1700
  %v1957 = vmul.f32 %v1702, %v1702
  %v1958 = vmul.f32 %v1789, %v1789
  %v1959 = vmul.f32 %v1791, %v1791
  %v1960 = vmul.f32 %v1878, %v1878
  %v1961 = vmul.f32 %v1880, %v1880
  %v1962 = vmul.f32 %v1938, %v273
  %v1963 = vmul.f32 %v1939, %v274
  %v1964 = vmul.f32 %v1940, %v275
  %v1965 = vmul.f32 %v1941, %v276
  %v1966 = vmul.f32 %v1942, %v277
  %v1967 = vmul.f32 %v1943, %v278
  %v1968 = vmul.f32 %v1944, %v273
  %v1969 = vmul.f32 %v1945, %v274
  %v1970 = vmul.f32 %v1946, %v275
  %v1971 = vmul.f32 %v1947, %v276
  %v1972 = vmul.f32 %v1948, %v277
  %v1973 = vmul.f32 %v1949, %v278
  %v1974 = vmul.f32 %v1950, %v273
  %v1975 = vmul.f32 %v1951, %v274
  %v1976 = vmul.f32 %v1952, %v275
  %v1977 = vmul.f32 %v1953, %v276
  %v1978 = vmul.f32 %v1954, %v277
  %v1979 = vmul.f32 %v1955, %v278
  %v1980 = vmul.f32 %v1956, %v273
  %v1981 = vmul.f32 %v1957, %v274
  %v1982 = vmul.f32 %v1958, %v275
  %v1983 = vmul.f32 %v1959, %v276
  %v1984 = vmul.f32 %v1960, %v277
  %v1985 = vmul.f32 %v1961, %v278
  %v1986 = vadd.f32 %v1962, %v1963
  %v1987 = vadd.f32 %v1986, %v1964
  %v1988 = vadd.f32 %v1987, %v1965
  %v1989 = vadd.f32 %v1988, %v1966
  %v1990 = vsel %vm904, %v1967, 0.0
  %v1991 = vadd.f32 %v1989, %v1990
  %1992 = vadd.xlane.f32.xlu0 %v1991
  %v1993 = vpop.xlane.xlu0 %1992
  %v1994 = vadd.f32 %v1968, %v1969
  %v1995 = vadd.f32 %v1994, %v1970
  %v1996 = vadd.f32 %v1995, %v1971
  %v1997 = vadd.f32 %v1996, %v1972
  %v1998 = vsel %vm904, %v1973, 0.0
  %v1999 = vadd.f32 %v1997, %v1998
  %2000 = vadd.xlane.f32.xlu0 %v1999
  %v2001 = vpop.xlane.xlu0 %2000
  %v2002 = vadd.f32 %v1974, %v1975
  %v2003 = vadd.f32 %v2002, %v1976
  %v2004 = vadd.f32 %v2003, %v1977
  %v2005 = vadd.f32 %v2004, %v1978
  %v2006 = vsel %vm904, %v1979, 0.0
  %v2007 = vadd.f32 %v2005, %v2006
  %2008 = vadd.xlane.f32.xlu0 %v2007
  %v2009 = vpop.xlane.xlu0 %2008
  %v2010 = vadd.f32 %v1980, %v1981
  %v2011 = vadd.f32 %v2010, %v1982
  %v2012 = vadd.f32 %v2011, %v1983
  %v2013 = vadd.f32 %v2012, %v1984
  %v2014 = vsel %vm904, %v1985, 0.0
  %v2015 = vadd.f32 %v2013, %v2014
  %2016 = vadd.xlane.f32.xlu0 %v2015
  %v2017 = vpop.xlane.xlu0 %2016
  %v2018 = vadd.f32 %v1913, %v1921
  %v2019 = vadd.f32 %v2018, %v1929
  %v2020 = vadd.f32 %v2019, %v1937
  %v2021 = vadd.f32 %v1993, %v2001
  %v2022 = vadd.f32 %v2021, %v2009
  %v2023 = vadd.f32 %v2022, %v2017
  %v2024 = vmul.f32 %v2020, 0.00048828125
  %v2025 = vmul.f32 %v2023, 0.00048828125
  %v2026 = vmul.f32 %v2024, %v2024
  %v2027 = vsub.f32 %v2025, %v2026
  %v2028 = vld [vmem:[%s7] sm:$0xff]
  %v2029 = vadd.f32 %v2027, 1e-05
  %v2030 = vrsqrt.pop %v2029
  %v2031 = vmul.f32 %v2028, %v2030
  %v2032 = vld [vmem:[%s8] sm:$0xff]
  %v2033 = vmul.f32 %v2024, %v2031
  %v2034 = vsub.f32 %v2032, %v2033
  %2036 = vset.pattern.permute.xlu0 0
  %2037 = vperm.xlu0 %2036, %v2031
  %v2038 = vpop.permute.xlu0 %2037
  %v2040 = vmul.f32 %v2038, %v1682
  %v2041 = vmul.f32 %v2038, %v1684
  %v2042 = vmul.f32 %v2038, %v1771
  %v2043 = vmul.f32 %v2038, %v1773
  %v2044 = vmul.f32 %v2038, %v1860
  %v2045 = vmul.f32 %v2038, %v1862
  %v2046 = vmul.f32 %v2038, %v1688
  %v2047 = vmul.f32 %v2038, %v1690
  %v2048 = vmul.f32 %v2038, %v1777
  %v2049 = vmul.f32 %v2038, %v1779
  %v2050 = vmul.f32 %v2038, %v1866
  %v2051 = vmul.f32 %v2038, %v1868
  %v2052 = vmul.f32 %v2038, %v1694
  %v2053 = vmul.f32 %v2038, %v1696
  %v2054 = vmul.f32 %v2038, %v1783
  %v2055 = vmul.f32 %v2038, %v1785
  %v2056 = vmul.f32 %v2038, %v1872
  %v2057 = vmul.f32 %v2038, %v1874
  %v2058 = vmul.f32 %v2038, %v1700
  %v2059 = vmul.f32 %v2038, %v1702
  %v2060 = vmul.f32 %v2038, %v1789
  %v2061 = vmul.f32 %v2038, %v1791
  %v2062 = vmul.f32 %v2038, %v1878
  %v2063 = vmul.f32 %v2038, %v1880
  %2065 = vset.pattern.permute.xlu0 0
  %2066 = vperm.xlu0 %2065, %v2034
  %v2067 = vpop.permute.xlu0 %2066
  %v2069 = vadd.f32 %v2040, %v2067
  %v2070 = vadd.f32 %v2041, %v2067
  %v2071 = vadd.f32 %v2042, %v2067
  %v2072 = vadd.f32 %v2043, %v2067
  %v2073 = vadd.f32 %v2044, %v2067
  %v2074 = vadd.f32 %v2045, %v2067
  %v2075 = vadd.f32 %v2046, %v2067
  %v2076 = vadd.f32 %v2047, %v2067
  %v2077 = vadd.f32 %v2048, %v2067
  %v2078 = vadd.f32 %v2049, %v2067
  %v2079 = vadd.f32 %v2050, %v2067
  %v2080 = vadd.f32 %v2051, %v2067
  %v2081 = vadd.f32 %v2052, %v2067
  %v2082 = vadd.f32 %v2053, %v2067
  %v2083 = vadd.f32 %v2054, %v2067
  %v2084 = vadd.f32 %v2055, %v2067
  %v2085 = vadd.f32 %v2056, %v2067
  %v2086 = vadd.f32 %v2057, %v2067
  %v2087 = vadd.f32 %v2058, %v2067
  %v2088 = vadd.f32 %v2059, %v2067
  %v2089 = vadd.f32 %v2060, %v2067
  %v2090 = vadd.f32 %v2061, %v2067
  %v2091 = vadd.f32 %v2062, %v2067
  %v2092 = vadd.f32 %v2063, %v2067
  %v2093 = vld [vmem:[#allocation3] sm:$0xff]
  %v2094 = vld [vmem:[#allocation3 + $0x8] sm:$0xff]
  %v2095 = vld [vmem:[#allocation3 + $0x10] sm:$0xff]
  %v2096 = vld [vmem:[#allocation3 + $0x18] sm:$0xff]
  %v2097 = vld [vmem:[#allocation3 + $0x20] sm:$0xff]
  %v2098 = vld [vmem:[#allocation3 + $0x28] sm:$0xff]
  %v2099 = vld [vmem:[#allocation3 + $0x30] sm:$0xff]
  %v2100 = vld [vmem:[#allocation3 + $0x38] sm:$0xff]
  %v2101 = vld [vmem:[#allocation3 + $0x40] sm:$0xff]
  %v2102 = vld [vmem:[#allocation3 + $0x48] sm:$0xff]
  %v2103 = vld [vmem:[#allocation3 + $0x50] sm:$0xff]
  %v2104 = vld [vmem:[#allocation3 + $0x58] sm:$0xff]
  %v2105 = vld [vmem:[#allocation3 + $0x60] sm:$0xff]
  %v2106 = vld [vmem:[#allocation3 + $0x68] sm:$0xff]
  %v2107 = vld [vmem:[#allocation3 + $0x70] sm:$0xff]
  %v2108 = vld [vmem:[#allocation3 + $0x78] sm:$0xff]
  %v2109 = vld [vmem:[#allocation3 + $0x80] sm:$0xff]
  %v2110 = vld [vmem:[#allocation3 + $0x88] sm:$0xff]
  %v2111 = vld [vmem:[#allocation3 + $0x90] sm:$0xff]
  %v2112 = vld [vmem:[#allocation3 + $0x98] sm:$0xff]
  %v2113 = vld [vmem:[#allocation3 + $0xa0] sm:$0xff]
  %v2114 = vld [vmem:[#allocation3 + $0xa8] sm:$0xff]
  %v2115 = vld [vmem:[#allocation3 + $0xb0] sm:$0xff]
  %v2116 = vld [vmem:[#allocation3 + $0xb8] sm:$0xff]
  %v2117 = vadd.f32 %v2069, %v2093
  %v2118 = vadd.f32 %v2070, %v2094
  %v2119 = vadd.f32 %v2071, %v2095
  %v2120 = vadd.f32 %v2072, %v2096
  %v2121 = vadd.f32 %v2073, %v2097
  %v2122 = vadd.f32 %v2074, %v2098
  %v2123 = vadd.f32 %v2075, %v2099
  %v2124 = vadd.f32 %v2076, %v2100
  %v2125 = vadd.f32 %v2077, %v2101
  %v2126 = vadd.f32 %v2078, %v2102
  %v2127 = vadd.f32 %v2079, %v2103
  %v2128 = vadd.f32 %v2080, %v2104
  %v2129 = vadd.f32 %v2081, %v2105
  %v2130 = vadd.f32 %v2082, %v2106
  %v2131 = vadd.f32 %v2083, %v2107
  %v2132 = vadd.f32 %v2084, %v2108
  %v2133 = vadd.f32 %v2085, %v2109
  %v2134 = vadd.f32 %v2086, %v2110
  %v2135 = vadd.f32 %v2087, %v2111
  %v2136 = vadd.f32 %v2088, %v2112
  %v2137 = vadd.f32 %v2089, %v2113
  %v2138 = vadd.f32 %v2090, %v2114
  %v2139 = vadd.f32 %v2091, %v2115
  %v2140 = vadd.f32 %v2092, %v2116
  %v2141 = vmax.f32 %v2117, 0.0
  %v2142 = vmax.f32 %v2118, 0.0
  %v2143 = vmax.f32 %v2119, 0.0
  %v2144 = vmax.f32 %v2120, 0.0
  %v2145 = vmax.f32 %v2121, 0.0
  %v2146 = vmax.f32 %v2122, 0.0
  %v2147 = vmax.f32 %v2123, 0.0
  %v2148 = vmax.f32 %v2124, 0.0
  %v2149 = vmax.f32 %v2125, 0.0
  %v2150 = vmax.f32 %v2126, 0.0
  %v2151 = vmax.f32 %v2127, 0.0
  %v2152 = vmax.f32 %v2128, 0.0
  %v2153 = vmax.f32 %v2129, 0.0
  %v2154 = vmax.f32 %v2130, 0.0
  %v2155 = vmax.f32 %v2131, 0.0
  %v2156 = vmax.f32 %v2132, 0.0
  %v2157 = vmax.f32 %v2133, 0.0
  %v2158 = vmax.f32 %v2134, 0.0
  %v2159 = vmax.f32 %v2135, 0.0
  %v2160 = vmax.f32 %v2136, 0.0
  %v2161 = vmax.f32 %v2137, 0.0
  %v2162 = vmax.f32 %v2138, 0.0
  %v2163 = vmax.f32 %v2139, 0.0
  %v2164 = vmax.f32 %v2140, 0.0
  %2165 = vst [vmem:[%s9] sm:$0xff] %v2141
  %2166 = vst [vmem:[%s9 + $0x8] sm:$0xff] %v2142
  %2167 = vst [vmem:[%s9 + $0x10] sm:$0xff] %v2143
  %2168 = vst [vmem:[%s9 + $0x18] sm:$0xff] %v2144
  %2169 = vst [vmem:[%s9 + $0x20] sm:$0xff] %v2145
  %2170 = vst.msk [vmem:[%s9 + $0x28] sm:$0xff] %vm904, %v2146
  %2171 = vst [vmem:[%s9 + $0x30] sm:$0xff] %v2147
  %2172 = vst [vmem:[%s9 + $0x38] sm:$0xff] %v2148
  %2173 = vst [vmem:[%s9 + $0x40] sm:$0xff] %v2149
  %2174 = vst [vmem:[%s9 + $0x48] sm:$0xff] %v2150
  %2175 = vst [vmem:[%s9 + $0x50] sm:$0xff] %v2151
  %2176 = vst.msk [vmem:[%s9 + $0x58] sm:$0xff] %vm904, %v2152
  %2177 = vst [vmem:[%s9 + $0x60] sm:$0xff] %v2153
  %2178 = vst [vmem:[%s9 + $0x68] sm:$0xff] %v2154
  %2179 = vst [vmem:[%s9 + $0x70] sm:$0xff] %v2155
  %2180 = vst [vmem:[%s9 + $0x78] sm:$0xff] %v2156
  %2181 = vst [vmem:[%s9 + $0x80] sm:$0xff] %v2157
  %2182 = vst.msk [vmem:[%s9 + $0x88] sm:$0xff] %vm904, %v2158
  %2183 = vst [vmem:[%s9 + $0x90] sm:$0xff] %v2159
  %2184 = vst [vmem:[%s9 + $0x98] sm:$0xff] %v2160
  %2185 = vst [vmem:[%s9 + $0xa0] sm:$0xff] %v2161
  %2186 = vst [vmem:[%s9 + $0xa8] sm:$0xff] %v2162
  %2187 = vst [vmem:[%s9 + $0xb0] sm:$0xff] %v2163
  %2188 = vst.msk [vmem:[%s9 + $0xb8] sm:$0xff] %vm904, %v2164
  // Predicated region
  $region38: #{type2_forward.1} parent=0 // pred_check
    _
  $region39: #{type2_forward.1} parent=0 // pred_check_branch
    %2190 = sbr.rel (0) target = $region41
  $region40: #{type2_forward.1} parent=0 // pred_region
    _
  $region41: #{type2_forward.1} parent=0 // pred_fallthru
    _
  // Predicated region
  $region42: #{type2_forward.1} parent=0 // pred_check
    _
  $region43: #{type2_forward.1} parent=0 // pred_check_branch
    %2192 = sbr.rel (0) target = $region45
  $region44: #{type2_forward.1} parent=0 // pred_region
    _
  $region45: #{type2_forward.1} parent=0 // pred_fallthru
    _

</llo_original>
